<compile_context>
chip_gen: v6e
topology: v6e:2x2x1
jax: 0.10.0
libtpu: 0.0.40
codegen_flags: <defaults>
</compile_context>

<pallas_src>
import functools

import jax
import jax.numpy as jnp
from jax import lax
from jax.experimental import pallas as pl
from jax.experimental.pallas import tpu as pltpu

NUM_FEATURES = 32
NUM_GROUPS = 2
EPS = 1e-5
LEAKY_SLOPE = 0.2


def _group_norm(h, gamma, beta, tb, hw):
    """GroupNorm(2 groups) on h of shape (C, tb*hw); statistics per batch element.

    Variance via E[x^2] - mean^2 so both reductions issue back-to-back to the XLU.
    tb is a small compile-time constant; hw is a multiple of 128 so the per-batch
    lane slices are vreg-aligned static slices."""
    C = h.shape[0]
    half = C // NUM_GROUPS
    n = float(half * hw)
    outs = []
    for b in range(tb):  # unrolled over the (small) fused batch
        hb = h[:, b * hw:(b + 1) * hw]
        g0 = hb[:half, :]
        g1 = hb[half:, :]
        s0 = jnp.sum(g0)
        q0 = jnp.sum(g0 * g0)
        s1 = jnp.sum(g1)
        q1 = jnp.sum(g1 * g1)
        m0 = s0 / n
        m1 = s1 / n
        v0 = jnp.maximum(q0 / n - m0 * m0, 0.0)
        v1 = jnp.maximum(q1 / n - m1 * m1, 0.0)
        n0 = (g0 - m0) * lax.rsqrt(v0 + EPS)
        n1 = (g1 - m1) * lax.rsqrt(v1 + EPS)
        outs.append(jnp.concatenate([n0, n1], axis=0))
    hn = outs[0] if tb == 1 else jnp.concatenate(outs, axis=1)
    return hn * gamma + beta


def process_phase_kernel(x_ref, wmat_ref, pvec_ref, o_ref, *, tb, hw):
    f = NUM_FEATURES
    x = x_ref[...]          # (1, tb*hw) f32
    p = pvec_ref[...]       # (f, 16)   packed per-channel params

    # Conv2d(1, f, k=1): K=1 matmul is degenerate -> VPU broadcast outer product.
    w1 = p[:, 0:1]
    b1 = p[:, 1:2]
    h = w1 * x + b1         # (f, tb*hw)

    # 3 x [GroupNorm, LeakyReLU(0.2), Conv2d(f, f, k=1)]
    for li, (gc, bec, bc) in enumerate(((2, 3, 4), (5, 6, 7), (8, 9, 10))):
        h = _group_norm(h, p[:, gc:gc + 1], p[:, bec:bec + 1], tb, hw)
        h = jnp.where(h >= 0.0, h, LEAKY_SLOPE * h)
        w = wmat_ref[li * f:(li + 1) * f, :]               # (f, f) static slice
        h = jnp.dot(w, h, preferred_element_type=jnp.float32) + p[:, bc:bc + 1]

    # Final GroupNorm + ReLU + Conv2d(f, 1, k=1)  (M=1 matmul -> sublane reduction)
    h = _group_norm(h, p[:, 11:12], p[:, 12:13], tb, hw)
    h = jnp.maximum(h, 0.0)
    w5col = p[:, 13:14]
    b5 = p[0:1, 14:15]
    out = jnp.sum(w5col * h, axis=0, keepdims=True) + b5   # (1, tb*hw)

    # forward: phases - net(phases)  (lane-dense store)
    o_ref[...] = x - out


def _pack_params(params):
    (w1, b1, g1, be1, w2, b2, g2, be2,
     w3, b3, g3, be3, w4, b4, g4, be4, w5, b5) = params
    f = NUM_FEATURES
    cols = [
        w1, b1,                       # 0, 1
        g1, be1, b2,                  # 2, 3, 4
        g2, be2, b3,                  # 5, 6, 7
        g3, be3, b4,                  # 8, 9, 10
        g4, be4,                      # 11, 12
        w5.reshape(f, 1),             # 13
        jnp.full((f, 1), b5.reshape(()), jnp.float32),  # 14 (only row 0 used)
        jnp.zeros((f, 1), jnp.float32),                 # 15 pad
    ]
    pvec = jnp.concatenate(cols, axis=1).astype(jnp.float32)         # (f, 16)
    wmat = jnp.concatenate([w2, w3, w4], axis=0).astype(jnp.float32)  # (3f, f)
    return wmat, pvec


def process_phase(phases_nchw, params):
    """phases_nchw: [B, 1, H, W] float32 -> [B, 1, H, W] float32."""
    B, C, H, W = phases_nchw.shape
    assert C == 1
    HW = H * W
    N = B * HW

    # Batch fused into the lane axis: one (1, B*HW) slab, single grid step.
    x = phases_nchw.reshape(1, N).astype(jnp.float32)
    wmat, pvec = _pack_params(params)

    kernel = functools.partial(process_phase_kernel, tb=B, hw=HW)
    out = pl.pallas_call(
        kernel,
        out_shape=jax.ShapeDtypeStruct((1, N), jnp.float32),
        grid=(1,),
        in_specs=[
            pl.BlockSpec((1, N), lambda i: (0, 0)),
            pl.BlockSpec((3 * NUM_FEATURES, NUM_FEATURES), lambda i: (0, 0)),
            pl.BlockSpec((NUM_FEATURES, 16), lambda i: (0, 0)),
        ],
        out_specs=pl.BlockSpec((1, N), lambda i: (0, 0)),
        compiler_params=pltpu.CompilerParams(
            dimension_semantics=("arbitrary",)),
    )(x, wmat, pvec)
    return out.reshape(B, 1, H, W)


def init_params(key):
    """Deterministic synthetic parameters (no checkpoint load)."""
    ks = jax.random.split(key, 16)
    f = NUM_FEATURES
    p = []
    # conv1: (32,1) weight, (32,1) bias
    p += [0.1 * jax.random.normal(ks[0], (f, 1), jnp.float32),
          0.1 * jax.random.normal(ks[1], (f, 1), jnp.float32)]
    # gn1 gamma/beta
    p += [1.0 + 0.05 * jax.random.normal(ks[2], (f, 1), jnp.float32),
          0.05 * jax.random.normal(ks[3], (f, 1), jnp.float32)]
    # conv2
    p += [0.1 * jax.random.normal(ks[4], (f, f), jnp.float32),
          0.1 * jax.random.normal(ks[5], (f, 1), jnp.float32)]
    # gn2
    p += [1.0 + 0.05 * jax.random.normal(ks[6], (f, 1), jnp.float32),
          0.05 * jax.random.normal(ks[7], (f, 1), jnp.float32)]
    # conv3
    p += [0.1 * jax.random.normal(ks[8], (f, f), jnp.float32),
          0.1 * jax.random.normal(ks[9], (f, 1), jnp.float32)]
    # gn3
    p += [1.0 + 0.05 * jax.random.normal(ks[10], (f, 1), jnp.float32),
          0.05 * jax.random.normal(ks[11], (f, 1), jnp.float32)]
    # conv4
    p += [0.1 * jax.random.normal(ks[12], (f, f), jnp.float32),
          0.1 * jax.random.normal(ks[13], (f, 1), jnp.float32)]
    # gn4
    p += [1.0 + 0.05 * jax.random.normal(ks[14], (f, 1), jnp.float32),
          0.05 * jax.random.normal(ks[15], (f, 1), jnp.float32)]
    # conv5: (1,32) weight, (1,1) bias
    k5a, k5b = jax.random.split(jax.random.fold_in(key, 123))
    p += [0.1 * jax.random.normal(k5a, (1, f), jnp.float32),
          0.1 * jax.random.normal(k5b, (1, 1), jnp.float32)]
    return p  # order: w1,b1,g1,be1, w2,b2,g2,be2, w3,b3,g3,be3, w4,b4,g4,be4, w5,b5


def reference_process_phase(phases_nchw, params):
    """Pure-JAX reference matching the PyTorch forward."""
    (w1, b1, g1, be1, w2, b2, g2, be2, w3, b3, g3, be3, w4, b4, g4, be4, w5, b5) = params
    B, C, H, W = phases_nchw.shape
    x = phases_nchw.reshape(B, C, H * W).astype(jnp.float32)

    def gn(h, gamma, beta):  # h: (B, C, HW)
        Bc, Cc, P = h.shape
        hg = h.reshape(Bc, NUM_GROUPS, Cc // NUM_GROUPS, P)
        m = jnp.mean(hg, axis=(2, 3), keepdims=True)
        v = jnp.mean((hg - m) ** 2, axis=(2, 3), keepdims=True)
        hn = ((hg - m) / jnp.sqrt(v + EPS)).reshape(Bc, Cc, P)
        return hn * gamma[None] + beta[None]

    def conv(h, w, b):  # 1x1 conv: (B,Cin,HW) -> (B,Cout,HW)
        return jnp.einsum("oi,bip->bop", w, h) + b[None]

    h = conv(x, w1, b1)
    for w, b, g, be in ((w2, b2, g1, be1), (w3, b3, g2, be2), (w4, b4, g3, be3)):
        h = gn(h, g, be)
        h = jnp.where(h >= 0, h, LEAKY_SLOPE * h)
        h = conv(h, w, b)
    h = gn(h, g4, be4)
    h = jnp.maximum(h, 0.0)
    out = conv(h, w5, b5)
    return (x - out).reshape(B, 1, H, W)


if __name__ == "__main__":
    key = jax.random.PRNGKey(0)
    k_x, k_p = jax.random.split(key)

    B, C, H, W = 2, 1, 16, 16  # channels = 1 + num_latent_codes(=0)
    phases = jax.random.uniform(k_x, (B, C, H, W), jnp.float32, minval=-3.14, maxval=3.14)

    params = init_params(k_p)

    out = jax.block_until_ready(process_phase(phases, params))

    ref = reference_process_phase(phases, params)
    assert out.shape == (B, 1, H, W)
    err = jnp.max(jnp.abs(out - ref))
    assert jnp.allclose(out, ref, atol=1e-4, rtol=1e-4), f"max abs err = {err}"

    print("KERNEL_OK")
</pallas_src>

<mosaic_0001>
module attributes {stable_mosaic.version = 11 : i64} {
  func.func @process_phase_kernel(%arg0: i32, %arg1: memref<1x512xf32, #tpu.memory_space<vmem>>, %arg2: memref<96x32xf32, #tpu.memory_space<vmem>>, %arg3: memref<32x16xf32, #tpu.memory_space<vmem>>, %arg4: memref<1x512xf32, #tpu.memory_space<vmem>>) attributes {dimension_semantics = [#tpu.dimension_semantics<arbitrary>], iteration_bounds = array<i64: 1>, scalar_prefetch = 0 : i64, scratch_operands = 0 : i64, tpu.core_type = #tpu.core_type<tc>, window_params = [{pipeline_mode = #tpu.pipeline_mode<synchronous>, transform_indices = @transform_0, window_bounds = array<i64: 1, 512>}, {pipeline_mode = #tpu.pipeline_mode<synchronous>, transform_indices = @transform_1, window_bounds = array<i64: 96, 32>}, {pipeline_mode = #tpu.pipeline_mode<synchronous>, transform_indices = @transform_2, window_bounds = array<i64: 32, 16>}, {pipeline_mode = #tpu.pipeline_mode<synchronous>, transform_indices = @transform_3, window_bounds = array<i64: 1, 512>}]} {
    %c0 = arith.constant 0 : index
    %c0_0 = arith.constant 0 : index
    %0 = vector.load %arg1[%c0, %c0_0] : memref<1x512xf32, #tpu.memory_space<vmem>>, vector<1x512xf32>
    %c0_1 = arith.constant 0 : index
    %c0_2 = arith.constant 0 : index
    %1 = vector.load %arg3[%c0_1, %c0_2] : memref<32x16xf32, #tpu.memory_space<vmem>>, vector<32x16xf32>
    %2 = vector.extract_strided_slice %1 {offsets = [0, 0], sizes = [32, 1], strides = [1, 1]} : vector<32x16xf32> to vector<32x1xf32>
    %3 = vector.extract_strided_slice %1 {offsets = [0, 1], sizes = [32, 1], strides = [1, 1]} : vector<32x16xf32> to vector<32x1xf32>
    %4 = vector.broadcast %2 : vector<32x1xf32> to vector<32x512xf32>
    %5 = vector.broadcast %0 : vector<1x512xf32> to vector<32x512xf32>
    %6 = arith.mulf %4, %5 : vector<32x512xf32>
    %7 = vector.broadcast %3 : vector<32x1xf32> to vector<32x512xf32>
    %8 = arith.addf %6, %7 : vector<32x512xf32>
    %9 = vector.extract_strided_slice %1 {offsets = [0, 2], sizes = [32, 1], strides = [1, 1]} : vector<32x16xf32> to vector<32x1xf32>
    %10 = vector.extract_strided_slice %1 {offsets = [0, 3], sizes = [32, 1], strides = [1, 1]} : vector<32x16xf32> to vector<32x1xf32>
    %11 = vector.extract_strided_slice %8 {offsets = [0, 0], sizes = [32, 256], strides = [1, 1]} : vector<32x512xf32> to vector<32x256xf32>
    %12 = vector.extract_strided_slice %11 {offsets = [0, 0], sizes = [16, 256], strides = [1, 1]} : vector<32x256xf32> to vector<16x256xf32>
    %13 = vector.extract_strided_slice %11 {offsets = [16, 0], sizes = [16, 256], strides = [1, 1]} : vector<32x256xf32> to vector<16x256xf32>
    %14 = vector.shape_cast %12 : vector<16x256xf32> to vector<1x16x256xf32>
    %cst = arith.constant dense<0.000000e+00> : vector<1xf32>
    %15 = vector.multi_reduction <add>, %14, %cst [1, 2] : vector<1x16x256xf32> to vector<1xf32>
    %16 = vector.shape_cast %15 : vector<1xf32> to vector<1x1x1xf32>
    %17 = vector.extract %16[0, 0, 0] : f32 from vector<1x1x1xf32>
    %18 = arith.mulf %12, %12 : vector<16x256xf32>
    %19 = vector.shape_cast %18 : vector<16x256xf32> to vector<1x16x256xf32>
    %cst_3 = arith.constant dense<0.000000e+00> : vector<1xf32>
    %20 = vector.multi_reduction <add>, %19, %cst_3 [1, 2] : vector<1x16x256xf32> to vector<1xf32>
    %21 = vector.shape_cast %20 : vector<1xf32> to vector<1x1x1xf32>
    %22 = vector.extract %21[0, 0, 0] : f32 from vector<1x1x1xf32>
    %23 = vector.shape_cast %13 : vector<16x256xf32> to vector<1x16x256xf32>
    %cst_4 = arith.constant dense<0.000000e+00> : vector<1xf32>
    %24 = vector.multi_reduction <add>, %23, %cst_4 [1, 2] : vector<1x16x256xf32> to vector<1xf32>
    %25 = vector.shape_cast %24 : vector<1xf32> to vector<1x1x1xf32>
    %26 = vector.extract %25[0, 0, 0] : f32 from vector<1x1x1xf32>
    %27 = arith.mulf %13, %13 : vector<16x256xf32>
    %28 = vector.shape_cast %27 : vector<16x256xf32> to vector<1x16x256xf32>
    %cst_5 = arith.constant dense<0.000000e+00> : vector<1xf32>
    %29 = vector.multi_reduction <add>, %28, %cst_5 [1, 2] : vector<1x16x256xf32> to vector<1xf32>
    %30 = vector.shape_cast %29 : vector<1xf32> to vector<1x1x1xf32>
    %31 = vector.extract %30[0, 0, 0] : f32 from vector<1x1x1xf32>
    %cst_6 = arith.constant 4.096000e+03 : f32
    %32 = arith.divf %17, %cst_6 : f32
    %cst_7 = arith.constant 4.096000e+03 : f32
    %33 = arith.divf %26, %cst_7 : f32
    %cst_8 = arith.constant 4.096000e+03 : f32
    %34 = arith.divf %22, %cst_8 : f32
    %35 = arith.mulf %32, %32 : f32
    %36 = arith.subf %34, %35 : f32
    %cst_9 = arith.constant 0.000000e+00 : f32
    %37 = arith.maximumf %36, %cst_9 : f32
    %cst_10 = arith.constant 4.096000e+03 : f32
    %38 = arith.divf %31, %cst_10 : f32
    %39 = arith.mulf %33, %33 : f32
    %40 = arith.subf %38, %39 : f32
    %cst_11 = arith.constant 0.000000e+00 : f32
    %41 = arith.maximumf %40, %cst_11 : f32
    %42 = vector.broadcast %32 : f32 to vector<16x256xf32>
    %43 = arith.subf %12, %42 : vector<16x256xf32>
    %cst_12 = arith.constant 9.99999974E-6 : f32
    %44 = arith.addf %37, %cst_12 : f32
    %45 = math.rsqrt %44 : f32
    %46 = vector.broadcast %45 : f32 to vector<16x256xf32>
    %47 = arith.mulf %43, %46 : vector<16x256xf32>
    %48 = vector.broadcast %33 : f32 to vector<16x256xf32>
    %49 = arith.subf %13, %48 : vector<16x256xf32>
    %cst_13 = arith.constant 9.99999974E-6 : f32
    %50 = arith.addf %41, %cst_13 : f32
    %51 = math.rsqrt %50 : f32
    %52 = vector.broadcast %51 : f32 to vector<16x256xf32>
    %53 = arith.mulf %49, %52 : vector<16x256xf32>
    %54 = tpu.concatenate %47, %53 in 0 : vector<16x256xf32>, vector<16x256xf32> -> vector<32x256xf32>
    %55 = vector.extract_strided_slice %8 {offsets = [0, 256], sizes = [32, 256], strides = [1, 1]} : vector<32x512xf32> to vector<32x256xf32>
    %56 = vector.extract_strided_slice %55 {offsets = [0, 0], sizes = [16, 256], strides = [1, 1]} : vector<32x256xf32> to vector<16x256xf32>
    %57 = vector.extract_strided_slice %55 {offsets = [16, 0], sizes = [16, 256], strides = [1, 1]} : vector<32x256xf32> to vector<16x256xf32>
    %58 = vector.shape_cast %56 : vector<16x256xf32> to vector<1x16x256xf32>
    %cst_14 = arith.constant dense<0.000000e+00> : vector<1xf32>
    %59 = vector.multi_reduction <add>, %58, %cst_14 [1, 2] : vector<1x16x256xf32> to vector<1xf32>
    %60 = vector.shape_cast %59 : vector<1xf32> to vector<1x1x1xf32>
    %61 = vector.extract %60[0, 0, 0] : f32 from vector<1x1x1xf32>
    %62 = arith.mulf %56, %56 : vector<16x256xf32>
    %63 = vector.shape_cast %62 : vector<16x256xf32> to vector<1x16x256xf32>
    %cst_15 = arith.constant dense<0.000000e+00> : vector<1xf32>
    %64 = vector.multi_reduction <add>, %63, %cst_15 [1, 2] : vector<1x16x256xf32> to vector<1xf32>
    %65 = vector.shape_cast %64 : vector<1xf32> to vector<1x1x1xf32>
    %66 = vector.extract %65[0, 0, 0] : f32 from vector<1x1x1xf32>
    %67 = vector.shape_cast %57 : vector<16x256xf32> to vector<1x16x256xf32>
    %cst_16 = arith.constant dense<0.000000e+00> : vector<1xf32>
    %68 = vector.multi_reduction <add>, %67, %cst_16 [1, 2] : vector<1x16x256xf32> to vector<1xf32>
    %69 = vector.shape_cast %68 : vector<1xf32> to vector<1x1x1xf32>
    %70 = vector.extract %69[0, 0, 0] : f32 from vector<1x1x1xf32>
    %71 = arith.mulf %57, %57 : vector<16x256xf32>
    %72 = vector.shape_cast %71 : vector<16x256xf32> to vector<1x16x256xf32>
    %cst_17 = arith.constant dense<0.000000e+00> : vector<1xf32>
    %73 = vector.multi_reduction <add>, %72, %cst_17 [1, 2] : vector<1x16x256xf32> to vector<1xf32>
    %74 = vector.shape_cast %73 : vector<1xf32> to vector<1x1x1xf32>
    %75 = vector.extract %74[0, 0, 0] : f32 from vector<1x1x1xf32>
    %cst_18 = arith.constant 4.096000e+03 : f32
    %76 = arith.divf %61, %cst_18 : f32
    %cst_19 = arith.constant 4.096000e+03 : f32
    %77 = arith.divf %70, %cst_19 : f32
    %cst_20 = arith.constant 4.096000e+03 : f32
    %78 = arith.divf %66, %cst_20 : f32
    %79 = arith.mulf %76, %76 : f32
    %80 = arith.subf %78, %79 : f32
    %cst_21 = arith.constant 0.000000e+00 : f32
    %81 = arith.maximumf %80, %cst_21 : f32
    %cst_22 = arith.constant 4.096000e+03 : f32
    %82 = arith.divf %75, %cst_22 : f32
    %83 = arith.mulf %77, %77 : f32
    %84 = arith.subf %82, %83 : f32
    %cst_23 = arith.constant 0.000000e+00 : f32
    %85 = arith.maximumf %84, %cst_23 : f32
    %86 = vector.broadcast %76 : f32 to vector<16x256xf32>
    %87 = arith.subf %56, %86 : vector<16x256xf32>
    %cst_24 = arith.constant 9.99999974E-6 : f32
    %88 = arith.addf %81, %cst_24 : f32
    %89 = math.rsqrt %88 : f32
    %90 = vector.broadcast %89 : f32 to vector<16x256xf32>
    %91 = arith.mulf %87, %90 : vector<16x256xf32>
    %92 = vector.broadcast %77 : f32 to vector<16x256xf32>
    %93 = arith.subf %57, %92 : vector<16x256xf32>
    %cst_25 = arith.constant 9.99999974E-6 : f32
    %94 = arith.addf %85, %cst_25 : f32
    %95 = math.rsqrt %94 : f32
    %96 = vector.broadcast %95 : f32 to vector<16x256xf32>
    %97 = arith.mulf %93, %96 : vector<16x256xf32>
    %98 = tpu.concatenate %91, %97 in 0 : vector<16x256xf32>, vector<16x256xf32> -> vector<32x256xf32>
    %99 = tpu.concatenate %54, %98 in 1 : vector<32x256xf32>, vector<32x256xf32> -> vector<32x512xf32>
    %100 = vector.broadcast %9 : vector<32x1xf32> to vector<32x512xf32>
    %101 = arith.mulf %99, %100 : vector<32x512xf32>
    %102 = vector.broadcast %10 : vector<32x1xf32> to vector<32x512xf32>
    %103 = arith.addf %101, %102 : vector<32x512xf32>
    %cst_26 = arith.constant 0.000000e+00 : f32
    %104 = vector.broadcast %cst_26 : f32 to vector<32x512xf32>
    %105 = arith.cmpf oge, %103, %104 : vector<32x512xf32>
    %cst_27 = arith.constant 2.000000e-01 : f32
    %106 = vector.broadcast %cst_27 : f32 to vector<32x512xf32>
    %107 = arith.mulf %106, %103 : vector<32x512xf32>
    %108 = arith.select %105, %103, %107 : vector<32x512xi1>, vector<32x512xf32>
    %c0_28 = arith.constant 0 : index
    %c0_29 = arith.constant 0 : index
    %109 = vector.load %arg2[%c0_28, %c0_29] : memref<96x32xf32, #tpu.memory_space<vmem>>, vector<32x32xf32>
    %cst_30 = arith.constant dense<0.000000e+00> : vector<32x512xf32>
    %110 = tpu.matmul %109, %108, %cst_30 {dimension_numbers = #tpu.dot_dimension_numbers<[1], [0], [0], [1], [0, 0, 1, 1], [], []>} : vector<32x32xf32>, vector<32x512xf32>, vector<32x512xf32> -> vector<32x512xf32>
    %111 = vector.extract_strided_slice %1 {offsets = [0, 4], sizes = [32, 1], strides = [1, 1]} : vector<32x16xf32> to vector<32x1xf32>
    %112 = vector.broadcast %111 : vector<32x1xf32> to vector<32x512xf32>
    %113 = arith.addf %110, %112 : vector<32x512xf32>
    %114 = vector.extract_strided_slice %1 {offsets = [0, 5], sizes = [32, 1], strides = [1, 1]} : vector<32x16xf32> to vector<32x1xf32>
    %115 = vector.extract_strided_slice %1 {offsets = [0, 6], sizes = [32, 1], strides = [1, 1]} : vector<32x16xf32> to vector<32x1xf32>
    %116 = vector.extract_strided_slice %113 {offsets = [0, 0], sizes = [32, 256], strides = [1, 1]} : vector<32x512xf32> to vector<32x256xf32>
    %117 = vector.extract_strided_slice %116 {offsets = [0, 0], sizes = [16, 256], strides = [1, 1]} : vector<32x256xf32> to vector<16x256xf32>
    %118 = vector.extract_strided_slice %116 {offsets = [16, 0], sizes = [16, 256], strides = [1, 1]} : vector<32x256xf32> to vector<16x256xf32>
    %119 = vector.shape_cast %117 : vector<16x256xf32> to vector<1x16x256xf32>
    %cst_31 = arith.constant dense<0.000000e+00> : vector<1xf32>
    %120 = vector.multi_reduction <add>, %119, %cst_31 [1, 2] : vector<1x16x256xf32> to vector<1xf32>
    %121 = vector.shape_cast %120 : vector<1xf32> to vector<1x1x1xf32>
    %122 = vector.extract %121[0, 0, 0] : f32 from vector<1x1x1xf32>
    %123 = arith.mulf %117, %117 : vector<16x256xf32>
    %124 = vector.shape_cast %123 : vector<16x256xf32> to vector<1x16x256xf32>
    %cst_32 = arith.constant dense<0.000000e+00> : vector<1xf32>
    %125 = vector.multi_reduction <add>, %124, %cst_32 [1, 2] : vector<1x16x256xf32> to vector<1xf32>
    %126 = vector.shape_cast %125 : vector<1xf32> to vector<1x1x1xf32>
    %127 = vector.extract %126[0, 0, 0] : f32 from vector<1x1x1xf32>
    %128 = vector.shape_cast %118 : vector<16x256xf32> to vector<1x16x256xf32>
    %cst_33 = arith.constant dense<0.000000e+00> : vector<1xf32>
    %129 = vector.multi_reduction <add>, %128, %cst_33 [1, 2] : vector<1x16x256xf32> to vector<1xf32>
    %130 = vector.shape_cast %129 : vector<1xf32> to vector<1x1x1xf32>
    %131 = vector.extract %130[0, 0, 0] : f32 from vector<1x1x1xf32>
    %132 = arith.mulf %118, %118 : vector<16x256xf32>
    %133 = vector.shape_cast %132 : vector<16x256xf32> to vector<1x16x256xf32>
    %cst_34 = arith.constant dense<0.000000e+00> : vector<1xf32>
    %134 = vector.multi_reduction <add>, %133, %cst_34 [1, 2] : vector<1x16x256xf32> to vector<1xf32>
    %135 = vector.shape_cast %134 : vector<1xf32> to vector<1x1x1xf32>
    %136 = vector.extract %135[0, 0, 0] : f32 from vector<1x1x1xf32>
    %cst_35 = arith.constant 4.096000e+03 : f32
    %137 = arith.divf %122, %cst_35 : f32
    %cst_36 = arith.constant 4.096000e+03 : f32
    %138 = arith.divf %131, %cst_36 : f32
    %cst_37 = arith.constant 4.096000e+03 : f32
    %139 = arith.divf %127, %cst_37 : f32
    %140 = arith.mulf %137, %137 : f32
    %141 = arith.subf %139, %140 : f32
    %cst_38 = arith.constant 0.000000e+00 : f32
    %142 = arith.maximumf %141, %cst_38 : f32
    %cst_39 = arith.constant 4.096000e+03 : f32
    %143 = arith.divf %136, %cst_39 : f32
    %144 = arith.mulf %138, %138 : f32
    %145 = arith.subf %143, %144 : f32
    %cst_40 = arith.constant 0.000000e+00 : f32
    %146 = arith.maximumf %145, %cst_40 : f32
    %147 = vector.broadcast %137 : f32 to vector<16x256xf32>
    %148 = arith.subf %117, %147 : vector<16x256xf32>
    %cst_41 = arith.constant 9.99999974E-6 : f32
    %149 = arith.addf %142, %cst_41 : f32
    %150 = math.rsqrt %149 : f32
    %151 = vector.broadcast %150 : f32 to vector<16x256xf32>
    %152 = arith.mulf %148, %151 : vector<16x256xf32>
    %153 = vector.broadcast %138 : f32 to vector<16x256xf32>
    %154 = arith.subf %118, %153 : vector<16x256xf32>
    %cst_42 = arith.constant 9.99999974E-6 : f32
    %155 = arith.addf %146, %cst_42 : f32
    %156 = math.rsqrt %155 : f32
    %157 = vector.broadcast %156 : f32 to vector<16x256xf32>
    %158 = arith.mulf %154, %157 : vector<16x256xf32>
    %159 = tpu.concatenate %152, %158 in 0 : vector<16x256xf32>, vector<16x256xf32> -> vector<32x256xf32>
    %160 = vector.extract_strided_slice %113 {offsets = [0, 256], sizes = [32, 256], strides = [1, 1]} : vector<32x512xf32> to vector<32x256xf32>
    %161 = vector.extract_strided_slice %160 {offsets = [0, 0], sizes = [16, 256], strides = [1, 1]} : vector<32x256xf32> to vector<16x256xf32>
    %162 = vector.extract_strided_slice %160 {offsets = [16, 0], sizes = [16, 256], strides = [1, 1]} : vector<32x256xf32> to vector<16x256xf32>
    %163 = vector.shape_cast %161 : vector<16x256xf32> to vector<1x16x256xf32>
    %cst_43 = arith.constant dense<0.000000e+00> : vector<1xf32>
    %164 = vector.multi_reduction <add>, %163, %cst_43 [1, 2] : vector<1x16x256xf32> to vector<1xf32>
    %165 = vector.shape_cast %164 : vector<1xf32> to vector<1x1x1xf32>
    %166 = vector.extract %165[0, 0, 0] : f32 from vector<1x1x1xf32>
    %167 = arith.mulf %161, %161 : vector<16x256xf32>
    %168 = vector.shape_cast %167 : vector<16x256xf32> to vector<1x16x256xf32>
    %cst_44 = arith.constant dense<0.000000e+00> : vector<1xf32>
    %169 = vector.multi_reduction <add>, %168, %cst_44 [1, 2] : vector<1x16x256xf32> to vector<1xf32>
    %170 = vector.shape_cast %169 : vector<1xf32> to vector<1x1x1xf32>
    %171 = vector.extract %170[0, 0, 0] : f32 from vector<1x1x1xf32>
    %172 = vector.shape_cast %162 : vector<16x256xf32> to vector<1x16x256xf32>
    %cst_45 = arith.constant dense<0.000000e+00> : vector<1xf32>
    %173 = vector.multi_reduction <add>, %172, %cst_45 [1, 2] : vector<1x16x256xf32> to vector<1xf32>
    %174 = vector.shape_cast %173 : vector<1xf32> to vector<1x1x1xf32>
    %175 = vector.extract %174[0, 0, 0] : f32 from vector<1x1x1xf32>
    %176 = arith.mulf %162, %162 : vector<16x256xf32>
    %177 = vector.shape_cast %176 : vector<16x256xf32> to vector<1x16x256xf32>
    %cst_46 = arith.constant dense<0.000000e+00> : vector<1xf32>
    %178 = vector.multi_reduction <add>, %177, %cst_46 [1, 2] : vector<1x16x256xf32> to vector<1xf32>
    %179 = vector.shape_cast %178 : vector<1xf32> to vector<1x1x1xf32>
    %180 = vector.extract %179[0, 0, 0] : f32 from vector<1x1x1xf32>
    %cst_47 = arith.constant 4.096000e+03 : f32
    %181 = arith.divf %166, %cst_47 : f32
    %cst_48 = arith.constant 4.096000e+03 : f32
    %182 = arith.divf %175, %cst_48 : f32
    %cst_49 = arith.constant 4.096000e+03 : f32
    %183 = arith.divf %171, %cst_49 : f32
    %184 = arith.mulf %181, %181 : f32
    %185 = arith.subf %183, %184 : f32
    %cst_50 = arith.constant 0.000000e+00 : f32
    %186 = arith.maximumf %185, %cst_50 : f32
    %cst_51 = arith.constant 4.096000e+03 : f32
    %187 = arith.divf %180, %cst_51 : f32
    %188 = arith.mulf %182, %182 : f32
    %189 = arith.subf %187, %188 : f32
    %cst_52 = arith.constant 0.000000e+00 : f32
    %190 = arith.maximumf %189, %cst_52 : f32
    %191 = vector.broadcast %181 : f32 to vector<16x256xf32>
    %192 = arith.subf %161, %191 : vector<16x256xf32>
    %cst_53 = arith.constant 9.99999974E-6 : f32
    %193 = arith.addf %186, %cst_53 : f32
    %194 = math.rsqrt %193 : f32
    %195 = vector.broadcast %194 : f32 to vector<16x256xf32>
    %196 = arith.mulf %192, %195 : vector<16x256xf32>
    %197 = vector.broadcast %182 : f32 to vector<16x256xf32>
    %198 = arith.subf %162, %197 : vector<16x256xf32>
    %cst_54 = arith.constant 9.99999974E-6 : f32
    %199 = arith.addf %190, %cst_54 : f32
    %200 = math.rsqrt %199 : f32
    %201 = vector.broadcast %200 : f32 to vector<16x256xf32>
    %202 = arith.mulf %198, %201 : vector<16x256xf32>
    %203 = tpu.concatenate %196, %202 in 0 : vector<16x256xf32>, vector<16x256xf32> -> vector<32x256xf32>
    %204 = tpu.concatenate %159, %203 in 1 : vector<32x256xf32>, vector<32x256xf32> -> vector<32x512xf32>
    %205 = vector.broadcast %114 : vector<32x1xf32> to vector<32x512xf32>
    %206 = arith.mulf %204, %205 : vector<32x512xf32>
    %207 = vector.broadcast %115 : vector<32x1xf32> to vector<32x512xf32>
    %208 = arith.addf %206, %207 : vector<32x512xf32>
    %cst_55 = arith.constant 0.000000e+00 : f32
    %209 = vector.broadcast %cst_55 : f32 to vector<32x512xf32>
    %210 = arith.cmpf oge, %208, %209 : vector<32x512xf32>
    %cst_56 = arith.constant 2.000000e-01 : f32
    %211 = vector.broadcast %cst_56 : f32 to vector<32x512xf32>
    %212 = arith.mulf %211, %208 : vector<32x512xf32>
    %213 = arith.select %210, %208, %212 : vector<32x512xi1>, vector<32x512xf32>
    %c32 = arith.constant 32 : index
    %c0_57 = arith.constant 0 : index
    %214 = vector.load %arg2[%c32, %c0_57] : memref<96x32xf32, #tpu.memory_space<vmem>>, vector<32x32xf32>
    %cst_58 = arith.constant dense<0.000000e+00> : vector<32x512xf32>
    %215 = tpu.matmul %214, %213, %cst_58 {dimension_numbers = #tpu.dot_dimension_numbers<[1], [0], [0], [1], [0, 0, 1, 1], [], []>} : vector<32x32xf32>, vector<32x512xf32>, vector<32x512xf32> -> vector<32x512xf32>
    %216 = vector.extract_strided_slice %1 {offsets = [0, 7], sizes = [32, 1], strides = [1, 1]} : vector<32x16xf32> to vector<32x1xf32>
    %217 = vector.broadcast %216 : vector<32x1xf32> to vector<32x512xf32>
    %218 = arith.addf %215, %217 : vector<32x512xf32>
    %219 = vector.extract_strided_slice %1 {offsets = [0, 8], sizes = [32, 1], strides = [1, 1]} : vector<32x16xf32> to vector<32x1xf32>
    %220 = vector.extract_strided_slice %1 {offsets = [0, 9], sizes = [32, 1], strides = [1, 1]} : vector<32x16xf32> to vector<32x1xf32>
    %221 = vector.extract_strided_slice %218 {offsets = [0, 0], sizes = [32, 256], strides = [1, 1]} : vector<32x512xf32> to vector<32x256xf32>
    %222 = vector.extract_strided_slice %221 {offsets = [0, 0], sizes = [16, 256], strides = [1, 1]} : vector<32x256xf32> to vector<16x256xf32>
    %223 = vector.extract_strided_slice %221 {offsets = [16, 0], sizes = [16, 256], strides = [1, 1]} : vector<32x256xf32> to vector<16x256xf32>
    %224 = vector.shape_cast %222 : vector<16x256xf32> to vector<1x16x256xf32>
    %cst_59 = arith.constant dense<0.000000e+00> : vector<1xf32>
    %225 = vector.multi_reduction <add>, %224, %cst_59 [1, 2] : vector<1x16x256xf32> to vector<1xf32>
    %226 = vector.shape_cast %225 : vector<1xf32> to vector<1x1x1xf32>
    %227 = vector.extract %226[0, 0, 0] : f32 from vector<1x1x1xf32>
    %228 = arith.mulf %222, %222 : vector<16x256xf32>
    %229 = vector.shape_cast %228 : vector<16x256xf32> to vector<1x16x256xf32>
    %cst_60 = arith.constant dense<0.000000e+00> : vector<1xf32>
    %230 = vector.multi_reduction <add>, %229, %cst_60 [1, 2] : vector<1x16x256xf32> to vector<1xf32>
    %231 = vector.shape_cast %230 : vector<1xf32> to vector<1x1x1xf32>
    %232 = vector.extract %231[0, 0, 0] : f32 from vector<1x1x1xf32>
    %233 = vector.shape_cast %223 : vector<16x256xf32> to vector<1x16x256xf32>
    %cst_61 = arith.constant dense<0.000000e+00> : vector<1xf32>
    %234 = vector.multi_reduction <add>, %233, %cst_61 [1, 2] : vector<1x16x256xf32> to vector<1xf32>
    %235 = vector.shape_cast %234 : vector<1xf32> to vector<1x1x1xf32>
    %236 = vector.extract %235[0, 0, 0] : f32 from vector<1x1x1xf32>
    %237 = arith.mulf %223, %223 : vector<16x256xf32>
    %238 = vector.shape_cast %237 : vector<16x256xf32> to vector<1x16x256xf32>
    %cst_62 = arith.constant dense<0.000000e+00> : vector<1xf32>
    %239 = vector.multi_reduction <add>, %238, %cst_62 [1, 2] : vector<1x16x256xf32> to vector<1xf32>
    %240 = vector.shape_cast %239 : vector<1xf32> to vector<1x1x1xf32>
    %241 = vector.extract %240[0, 0, 0] : f32 from vector<1x1x1xf32>
    %cst_63 = arith.constant 4.096000e+03 : f32
    %242 = arith.divf %227, %cst_63 : f32
    %cst_64 = arith.constant 4.096000e+03 : f32
    %243 = arith.divf %236, %cst_64 : f32
    %cst_65 = arith.constant 4.096000e+03 : f32
    %244 = arith.divf %232, %cst_65 : f32
    %245 = arith.mulf %242, %242 : f32
    %246 = arith.subf %244, %245 : f32
    %cst_66 = arith.constant 0.000000e+00 : f32
    %247 = arith.maximumf %246, %cst_66 : f32
    %cst_67 = arith.constant 4.096000e+03 : f32
    %248 = arith.divf %241, %cst_67 : f32
    %249 = arith.mulf %243, %243 : f32
    %250 = arith.subf %248, %249 : f32
    %cst_68 = arith.constant 0.000000e+00 : f32
    %251 = arith.maximumf %250, %cst_68 : f32
    %252 = vector.broadcast %242 : f32 to vector<16x256xf32>
    %253 = arith.subf %222, %252 : vector<16x256xf32>
    %cst_69 = arith.constant 9.99999974E-6 : f32
    %254 = arith.addf %247, %cst_69 : f32
    %255 = math.rsqrt %254 : f32
    %256 = vector.broadcast %255 : f32 to vector<16x256xf32>
    %257 = arith.mulf %253, %256 : vector<16x256xf32>
    %258 = vector.broadcast %243 : f32 to vector<16x256xf32>
    %259 = arith.subf %223, %258 : vector<16x256xf32>
    %cst_70 = arith.constant 9.99999974E-6 : f32
    %260 = arith.addf %251, %cst_70 : f32
    %261 = math.rsqrt %260 : f32
    %262 = vector.broadcast %261 : f32 to vector<16x256xf32>
    %263 = arith.mulf %259, %262 : vector<16x256xf32>
    %264 = tpu.concatenate %257, %263 in 0 : vector<16x256xf32>, vector<16x256xf32> -> vector<32x256xf32>
    %265 = vector.extract_strided_slice %218 {offsets = [0, 256], sizes = [32, 256], strides = [1, 1]} : vector<32x512xf32> to vector<32x256xf32>
    %266 = vector.extract_strided_slice %265 {offsets = [0, 0], sizes = [16, 256], strides = [1, 1]} : vector<32x256xf32> to vector<16x256xf32>
    %267 = vector.extract_strided_slice %265 {offsets = [16, 0], sizes = [16, 256], strides = [1, 1]} : vector<32x256xf32> to vector<16x256xf32>
    %268 = vector.shape_cast %266 : vector<16x256xf32> to vector<1x16x256xf32>
    %cst_71 = arith.constant dense<0.000000e+00> : vector<1xf32>
    %269 = vector.multi_reduction <add>, %268, %cst_71 [1, 2] : vector<1x16x256xf32> to vector<1xf32>
    %270 = vector.shape_cast %269 : vector<1xf32> to vector<1x1x1xf32>
    %271 = vector.extract %270[0, 0, 0] : f32 from vector<1x1x1xf32>
    %272 = arith.mulf %266, %266 : vector<16x256xf32>
    %273 = vector.shape_cast %272 : vector<16x256xf32> to vector<1x16x256xf32>
    %cst_72 = arith.constant dense<0.000000e+00> : vector<1xf32>
    %274 = vector.multi_reduction <add>, %273, %cst_72 [1, 2] : vector<1x16x256xf32> to vector<1xf32>
    %275 = vector.shape_cast %274 : vector<1xf32> to vector<1x1x1xf32>
    %276 = vector.extract %275[0, 0, 0] : f32 from vector<1x1x1xf32>
    %277 = vector.shape_cast %267 : vector<16x256xf32> to vector<1x16x256xf32>
    %cst_73 = arith.constant dense<0.000000e+00> : vector<1xf32>
    %278 = vector.multi_reduction <add>, %277, %cst_73 [1, 2] : vector<1x16x256xf32> to vector<1xf32>
    %279 = vector.shape_cast %278 : vector<1xf32> to vector<1x1x1xf32>
    %280 = vector.extract %279[0, 0, 0] : f32 from vector<1x1x1xf32>
    %281 = arith.mulf %267, %267 : vector<16x256xf32>
    %282 = vector.shape_cast %281 : vector<16x256xf32> to vector<1x16x256xf32>
    %cst_74 = arith.constant dense<0.000000e+00> : vector<1xf32>
    %283 = vector.multi_reduction <add>, %282, %cst_74 [1, 2] : vector<1x16x256xf32> to vector<1xf32>
    %284 = vector.shape_cast %283 : vector<1xf32> to vector<1x1x1xf32>
    %285 = vector.extract %284[0, 0, 0] : f32 from vector<1x1x1xf32>
    %cst_75 = arith.constant 4.096000e+03 : f32
    %286 = arith.divf %271, %cst_75 : f32
    %cst_76 = arith.constant 4.096000e+03 : f32
    %287 = arith.divf %280, %cst_76 : f32
    %cst_77 = arith.constant 4.096000e+03 : f32
    %288 = arith.divf %276, %cst_77 : f32
    %289 = arith.mulf %286, %286 : f32
    %290 = arith.subf %288, %289 : f32
    %cst_78 = arith.constant 0.000000e+00 : f32
    %291 = arith.maximumf %290, %cst_78 : f32
    %cst_79 = arith.constant 4.096000e+03 : f32
    %292 = arith.divf %285, %cst_79 : f32
    %293 = arith.mulf %287, %287 : f32
    %294 = arith.subf %292, %293 : f32
    %cst_80 = arith.constant 0.000000e+00 : f32
    %295 = arith.maximumf %294, %cst_80 : f32
    %296 = vector.broadcast %286 : f32 to vector<16x256xf32>
    %297 = arith.subf %266, %296 : vector<16x256xf32>
    %cst_81 = arith.constant 9.99999974E-6 : f32
    %298 = arith.addf %291, %cst_81 : f32
    %299 = math.rsqrt %298 : f32
    %300 = vector.broadcast %299 : f32 to vector<16x256xf32>
    %301 = arith.mulf %297, %300 : vector<16x256xf32>
    %302 = vector.broadcast %287 : f32 to vector<16x256xf32>
    %303 = arith.subf %267, %302 : vector<16x256xf32>
    %cst_82 = arith.constant 9.99999974E-6 : f32
    %304 = arith.addf %295, %cst_82 : f32
    %305 = math.rsqrt %304 : f32
    %306 = vector.broadcast %305 : f32 to vector<16x256xf32>
    %307 = arith.mulf %303, %306 : vector<16x256xf32>
    %308 = tpu.concatenate %301, %307 in 0 : vector<16x256xf32>, vector<16x256xf32> -> vector<32x256xf32>
    %309 = tpu.concatenate %264, %308 in 1 : vector<32x256xf32>, vector<32x256xf32> -> vector<32x512xf32>
    %310 = vector.broadcast %219 : vector<32x1xf32> to vector<32x512xf32>
    %311 = arith.mulf %309, %310 : vector<32x512xf32>
    %312 = vector.broadcast %220 : vector<32x1xf32> to vector<32x512xf32>
    %313 = arith.addf %311, %312 : vector<32x512xf32>
    %cst_83 = arith.constant 0.000000e+00 : f32
    %314 = vector.broadcast %cst_83 : f32 to vector<32x512xf32>
    %315 = arith.cmpf oge, %313, %314 : vector<32x512xf32>
    %cst_84 = arith.constant 2.000000e-01 : f32
    %316 = vector.broadcast %cst_84 : f32 to vector<32x512xf32>
    %317 = arith.mulf %316, %313 : vector<32x512xf32>
    %318 = arith.select %315, %313, %317 : vector<32x512xi1>, vector<32x512xf32>
    %c64 = arith.constant 64 : index
    %c0_85 = arith.constant 0 : index
    %319 = vector.load %arg2[%c64, %c0_85] : memref<96x32xf32, #tpu.memory_space<vmem>>, vector<32x32xf32>
    %cst_86 = arith.constant dense<0.000000e+00> : vector<32x512xf32>
    %320 = tpu.matmul %319, %318, %cst_86 {dimension_numbers = #tpu.dot_dimension_numbers<[1], [0], [0], [1], [0, 0, 1, 1], [], []>} : vector<32x32xf32>, vector<32x512xf32>, vector<32x512xf32> -> vector<32x512xf32>
    %321 = vector.extract_strided_slice %1 {offsets = [0, 10], sizes = [32, 1], strides = [1, 1]} : vector<32x16xf32> to vector<32x1xf32>
    %322 = vector.broadcast %321 : vector<32x1xf32> to vector<32x512xf32>
    %323 = arith.addf %320, %322 : vector<32x512xf32>
    %324 = vector.extract_strided_slice %1 {offsets = [0, 11], sizes = [32, 1], strides = [1, 1]} : vector<32x16xf32> to vector<32x1xf32>
    %325 = vector.extract_strided_slice %1 {offsets = [0, 12], sizes = [32, 1], strides = [1, 1]} : vector<32x16xf32> to vector<32x1xf32>
    %326 = vector.extract_strided_slice %323 {offsets = [0, 0], sizes = [32, 256], strides = [1, 1]} : vector<32x512xf32> to vector<32x256xf32>
    %327 = vector.extract_strided_slice %326 {offsets = [0, 0], sizes = [16, 256], strides = [1, 1]} : vector<32x256xf32> to vector<16x256xf32>
    %328 = vector.extract_strided_slice %326 {offsets = [16, 0], sizes = [16, 256], strides = [1, 1]} : vector<32x256xf32> to vector<16x256xf32>
    %329 = vector.shape_cast %327 : vector<16x256xf32> to vector<1x16x256xf32>
    %cst_87 = arith.constant dense<0.000000e+00> : vector<1xf32>
    %330 = vector.multi_reduction <add>, %329, %cst_87 [1, 2] : vector<1x16x256xf32> to vector<1xf32>
    %331 = vector.shape_cast %330 : vector<1xf32> to vector<1x1x1xf32>
    %332 = vector.extract %331[0, 0, 0] : f32 from vector<1x1x1xf32>
    %333 = arith.mulf %327, %327 : vector<16x256xf32>
    %334 = vector.shape_cast %333 : vector<16x256xf32> to vector<1x16x256xf32>
    %cst_88 = arith.constant dense<0.000000e+00> : vector<1xf32>
    %335 = vector.multi_reduction <add>, %334, %cst_88 [1, 2] : vector<1x16x256xf32> to vector<1xf32>
    %336 = vector.shape_cast %335 : vector<1xf32> to vector<1x1x1xf32>
    %337 = vector.extract %336[0, 0, 0] : f32 from vector<1x1x1xf32>
    %338 = vector.shape_cast %328 : vector<16x256xf32> to vector<1x16x256xf32>
    %cst_89 = arith.constant dense<0.000000e+00> : vector<1xf32>
    %339 = vector.multi_reduction <add>, %338, %cst_89 [1, 2] : vector<1x16x256xf32> to vector<1xf32>
    %340 = vector.shape_cast %339 : vector<1xf32> to vector<1x1x1xf32>
    %341 = vector.extract %340[0, 0, 0] : f32 from vector<1x1x1xf32>
    %342 = arith.mulf %328, %328 : vector<16x256xf32>
    %343 = vector.shape_cast %342 : vector<16x256xf32> to vector<1x16x256xf32>
    %cst_90 = arith.constant dense<0.000000e+00> : vector<1xf32>
    %344 = vector.multi_reduction <add>, %343, %cst_90 [1, 2] : vector<1x16x256xf32> to vector<1xf32>
    %345 = vector.shape_cast %344 : vector<1xf32> to vector<1x1x1xf32>
    %346 = vector.extract %345[0, 0, 0] : f32 from vector<1x1x1xf32>
    %cst_91 = arith.constant 4.096000e+03 : f32
    %347 = arith.divf %332, %cst_91 : f32
    %cst_92 = arith.constant 4.096000e+03 : f32
    %348 = arith.divf %341, %cst_92 : f32
    %cst_93 = arith.constant 4.096000e+03 : f32
    %349 = arith.divf %337, %cst_93 : f32
    %350 = arith.mulf %347, %347 : f32
    %351 = arith.subf %349, %350 : f32
    %cst_94 = arith.constant 0.000000e+00 : f32
    %352 = arith.maximumf %351, %cst_94 : f32
    %cst_95 = arith.constant 4.096000e+03 : f32
    %353 = arith.divf %346, %cst_95 : f32
    %354 = arith.mulf %348, %348 : f32
    %355 = arith.subf %353, %354 : f32
    %cst_96 = arith.constant 0.000000e+00 : f32
    %356 = arith.maximumf %355, %cst_96 : f32
    %357 = vector.broadcast %347 : f32 to vector<16x256xf32>
    %358 = arith.subf %327, %357 : vector<16x256xf32>
    %cst_97 = arith.constant 9.99999974E-6 : f32
    %359 = arith.addf %352, %cst_97 : f32
    %360 = math.rsqrt %359 : f32
    %361 = vector.broadcast %360 : f32 to vector<16x256xf32>
    %362 = arith.mulf %358, %361 : vector<16x256xf32>
    %363 = vector.broadcast %348 : f32 to vector<16x256xf32>
    %364 = arith.subf %328, %363 : vector<16x256xf32>
    %cst_98 = arith.constant 9.99999974E-6 : f32
    %365 = arith.addf %356, %cst_98 : f32
    %366 = math.rsqrt %365 : f32
    %367 = vector.broadcast %366 : f32 to vector<16x256xf32>
    %368 = arith.mulf %364, %367 : vector<16x256xf32>
    %369 = tpu.concatenate %362, %368 in 0 : vector<16x256xf32>, vector<16x256xf32> -> vector<32x256xf32>
    %370 = vector.extract_strided_slice %323 {offsets = [0, 256], sizes = [32, 256], strides = [1, 1]} : vector<32x512xf32> to vector<32x256xf32>
    %371 = vector.extract_strided_slice %370 {offsets = [0, 0], sizes = [16, 256], strides = [1, 1]} : vector<32x256xf32> to vector<16x256xf32>
    %372 = vector.extract_strided_slice %370 {offsets = [16, 0], sizes = [16, 256], strides = [1, 1]} : vector<32x256xf32> to vector<16x256xf32>
    %373 = vector.shape_cast %371 : vector<16x256xf32> to vector<1x16x256xf32>
    %cst_99 = arith.constant dense<0.000000e+00> : vector<1xf32>
    %374 = vector.multi_reduction <add>, %373, %cst_99 [1, 2] : vector<1x16x256xf32> to vector<1xf32>
    %375 = vector.shape_cast %374 : vector<1xf32> to vector<1x1x1xf32>
    %376 = vector.extract %375[0, 0, 0] : f32 from vector<1x1x1xf32>
    %377 = arith.mulf %371, %371 : vector<16x256xf32>
    %378 = vector.shape_cast %377 : vector<16x256xf32> to vector<1x16x256xf32>
    %cst_100 = arith.constant dense<0.000000e+00> : vector<1xf32>
    %379 = vector.multi_reduction <add>, %378, %cst_100 [1, 2] : vector<1x16x256xf32> to vector<1xf32>
    %380 = vector.shape_cast %379 : vector<1xf32> to vector<1x1x1xf32>
    %381 = vector.extract %380[0, 0, 0] : f32 from vector<1x1x1xf32>
    %382 = vector.shape_cast %372 : vector<16x256xf32> to vector<1x16x256xf32>
    %cst_101 = arith.constant dense<0.000000e+00> : vector<1xf32>
    %383 = vector.multi_reduction <add>, %382, %cst_101 [1, 2] : vector<1x16x256xf32> to vector<1xf32>
    %384 = vector.shape_cast %383 : vector<1xf32> to vector<1x1x1xf32>
    %385 = vector.extract %384[0, 0, 0] : f32 from vector<1x1x1xf32>
    %386 = arith.mulf %372, %372 : vector<16x256xf32>
    %387 = vector.shape_cast %386 : vector<16x256xf32> to vector<1x16x256xf32>
    %cst_102 = arith.constant dense<0.000000e+00> : vector<1xf32>
    %388 = vector.multi_reduction <add>, %387, %cst_102 [1, 2] : vector<1x16x256xf32> to vector<1xf32>
    %389 = vector.shape_cast %388 : vector<1xf32> to vector<1x1x1xf32>
    %390 = vector.extract %389[0, 0, 0] : f32 from vector<1x1x1xf32>
    %cst_103 = arith.constant 4.096000e+03 : f32
    %391 = arith.divf %376, %cst_103 : f32
    %cst_104 = arith.constant 4.096000e+03 : f32
    %392 = arith.divf %385, %cst_104 : f32
    %cst_105 = arith.constant 4.096000e+03 : f32
    %393 = arith.divf %381, %cst_105 : f32
    %394 = arith.mulf %391, %391 : f32
    %395 = arith.subf %393, %394 : f32
    %cst_106 = arith.constant 0.000000e+00 : f32
    %396 = arith.maximumf %395, %cst_106 : f32
    %cst_107 = arith.constant 4.096000e+03 : f32
    %397 = arith.divf %390, %cst_107 : f32
    %398 = arith.mulf %392, %392 : f32
    %399 = arith.subf %397, %398 : f32
    %cst_108 = arith.constant 0.000000e+00 : f32
    %400 = arith.maximumf %399, %cst_108 : f32
    %401 = vector.broadcast %391 : f32 to vector<16x256xf32>
    %402 = arith.subf %371, %401 : vector<16x256xf32>
    %cst_109 = arith.constant 9.99999974E-6 : f32
    %403 = arith.addf %396, %cst_109 : f32
    %404 = math.rsqrt %403 : f32
    %405 = vector.broadcast %404 : f32 to vector<16x256xf32>
    %406 = arith.mulf %402, %405 : vector<16x256xf32>
    %407 = vector.broadcast %392 : f32 to vector<16x256xf32>
    %408 = arith.subf %372, %407 : vector<16x256xf32>
    %cst_110 = arith.constant 9.99999974E-6 : f32
    %409 = arith.addf %400, %cst_110 : f32
    %410 = math.rsqrt %409 : f32
    %411 = vector.broadcast %410 : f32 to vector<16x256xf32>
    %412 = arith.mulf %408, %411 : vector<16x256xf32>
    %413 = tpu.concatenate %406, %412 in 0 : vector<16x256xf32>, vector<16x256xf32> -> vector<32x256xf32>
    %414 = tpu.concatenate %369, %413 in 1 : vector<32x256xf32>, vector<32x256xf32> -> vector<32x512xf32>
    %415 = vector.broadcast %324 : vector<32x1xf32> to vector<32x512xf32>
    %416 = arith.mulf %414, %415 : vector<32x512xf32>
    %417 = vector.broadcast %325 : vector<32x1xf32> to vector<32x512xf32>
    %418 = arith.addf %416, %417 : vector<32x512xf32>
    %cst_111 = arith.constant 0.000000e+00 : f32
    %419 = vector.broadcast %cst_111 : f32 to vector<32x512xf32>
    %420 = arith.maximumf %418, %419 : vector<32x512xf32>
    %421 = vector.extract_strided_slice %1 {offsets = [0, 13], sizes = [32, 1], strides = [1, 1]} : vector<32x16xf32> to vector<32x1xf32>
    %422 = vector.extract_strided_slice %1 {offsets = [0, 14], sizes = [1, 1], strides = [1, 1]} : vector<32x16xf32> to vector<1x1xf32>
    %423 = vector.broadcast %421 : vector<32x1xf32> to vector<32x512xf32>
    %424 = arith.mulf %423, %420 : vector<32x512xf32>
    %cst_112 = arith.constant dense<0.000000e+00> : vector<512xf32>
    %425 = vector.multi_reduction <add>, %424, %cst_112 [0] : vector<32x512xf32> to vector<512xf32>
    %426 = vector.shape_cast %425 : vector<512xf32> to vector<1x512xf32>
    %427 = vector.broadcast %422 : vector<1x1xf32> to vector<1x512xf32>
    %428 = arith.addf %426, %427 : vector<1x512xf32>
    %429 = arith.subf %0, %428 : vector<1x512xf32>
    %c0_113 = arith.constant 0 : index
    %c0_114 = arith.constant 0 : index
    %430 = vector.load %arg4[%c0_113, %c0_114] : memref<1x512xf32, #tpu.memory_space<vmem>>, vector<1x512xf32>
    tpu.vector_store %arg4[%c0_113, %c0_114], %429 {strides = array<i32>} : memref<1x512xf32, #tpu.memory_space<vmem>>, vector<1x512xf32>,
    return
  }
  func.func @transform_0(%arg0: i32) -> (i32, i32) {
    %c0_i32 = arith.constant 0 : i32
    %c0_i32_0 = arith.constant 0 : i32
    %c0_i32_1 = arith.constant 0 : i32
    return %c0_i32, %c0_i32_0 : i32, i32
  }
  func.func @transform_1(%arg0: i32) -> (i32, i32) {
    %c0_i32 = arith.constant 0 : i32
    %c0_i32_0 = arith.constant 0 : i32
    %c0_i32_1 = arith.constant 0 : i32
    return %c0_i32, %c0_i32_0 : i32, i32
  }
  func.func @transform_2(%arg0: i32) -> (i32, i32) {
    %c0_i32 = arith.constant 0 : i32
    %c0_i32_0 = arith.constant 0 : i32
    %c0_i32_1 = arith.constant 0 : i32
    return %c0_i32, %c0_i32_0 : i32, i32
  }
  func.func @transform_3(%arg0: i32) -> (i32, i32) {
    %c0_i32 = arith.constant 0 : i32
    %c0_i32_0 = arith.constant 0 : i32
    %c0_i32_1 = arith.constant 0 : i32
    return %c0_i32, %c0_i32_0 : i32, i32
  }
}

</mosaic_0001>

<llo_original>
// kernel: tpu_custom_call.1
$region0: #{tpu_custom_call.1}
  #allocation0 [shape = 'u32[]', space=smem, size = 0x4, offset = 0x4, fixed_abs, tag = 'smem constant byte address 0x4 - core index']
  #allocation1 [shape = 'u32[144,128]{1,0:T(1,128)}', space=vmem, size = 0x12000, scoped, tag = 'internal scratch']
  %s0 = inlined_call_operand.vmem [shape: f32[1,512], index: 0, kind: input, shape index: {}]
  %s1 = inlined_call_operand.vmem [shape: f32[96,32], index: 1, kind: input, shape index: {}]
  %s2 = inlined_call_operand.vmem [shape: f32[32,16], index: 2, kind: input, shape index: {}]
  %s3 = inlined_call_operand.hbm [shape: f32[1,512], index: 3, kind: output, shape index: {}]
  %s4 = sld [smem:[#allocation0]]
  $region22: #{tpu_custom_call.1} parent=0
    _
  %s6 = ssub.s32 1, %s4
  %s7 = scalar_select 0, %s6, %s4
  $region1: #{tpu_custom_call.1} parent=0
    #allocation2 [shape = 'u8[2048]{0}', space=vmem, size = 0x800, scoped, tag = 'output window, operand 0, single buffered']
    #allocation3 [shape = 's32[1]{0}', space=sflag, size = 0x4, scoped, tag = 'scoped memory for tpu_custom_call.1']
    %8 = vsyncpa [#allocation3], 0
    // Predicated region
    $region2: #{tpu_custom_call.1} parent=1 // pred_check
      _
    $region3: #{tpu_custom_call.1} parent=1 // pred_check_branch
      %10 = sbr.rel (0) target = $region5
    $region4: #{tpu_custom_call.1} parent=1 // pred_region
      _
    $region5: #{tpu_custom_call.1} parent=1 // pred_fallthru
      _
    // Predicated region
    $region6: #{tpu_custom_call.1} parent=1 // pred_check
      _
    $region7: #{tpu_custom_call.1} parent=1 // pred_check_branch
      %12 = sbr.rel (0) target = $region9
    $region8: #{tpu_custom_call.1} parent=1 // pred_region
      _
    $region9: #{tpu_custom_call.1} parent=1 // pred_fallthru
      _
    // Predicated region
    $region10: #{tpu_custom_call.1} parent=1 // pred_check
      _
    $region11: #{tpu_custom_call.1} parent=1 // pred_check_branch
      %14 = sbr.rel (0) target = $region13
    $region12: #{tpu_custom_call.1} parent=1 // pred_region
      _
    $region13: #{tpu_custom_call.1} parent=1 // pred_fallthru
      _
    %v15 = vld [vmem:[%s0] sm:$0xf]
    %v16 = vld [vmem:[%s2] sm:$0xff]
    %v17 = vld [vmem:[%s2 + $0x8] sm:$0xff]
    %v18 = vld [vmem:[%s2 + $0x10] sm:$0xff]
    %v19 = vld [vmem:[%s2 + $0x18] sm:$0xff]
    %21 = vset.pattern.permute.xlu0 0
    %22 = vperm.xlu0 %21, %v16
    %v23 = vpop.permute.xlu0 %22
    %26 = vset.pattern.permute.xlu0 0
    %27 = vperm.xlu0 %26, %v17
    %v28 = vpop.permute.xlu0 %27
    %31 = vset.pattern.permute.xlu0 0
    %32 = vperm.xlu0 %31, %v18
    %v33 = vpop.permute.xlu0 %32
    %36 = vset.pattern.permute.xlu0 0
    %37 = vperm.xlu0 %36, %v19
    %v38 = vpop.permute.xlu0 %37
    %v41 = vlaneseq
    %v42 = vshrl.u32 %v41, 7
    %v43 = vsub.s32 0, %v42
    %v44 = vrot.slane %v15, %v43
    %v45 = vlaneseq
    %v46 = vshrl.u32 %v45, 7
    %v47 = vsub.s32 1, %v46
    %v48 = vrot.slane %v15, %v47
    %v49 = vlaneseq
    %v50 = vshrl.u32 %v49, 7
    %v51 = vsub.s32 2, %v50
    %v52 = vrot.slane %v15, %v51
    %v53 = vlaneseq
    %v54 = vshrl.u32 %v53, 7
    %v55 = vsub.s32 3, %v54
    %v56 = vrot.slane %v15, %v55
    %v61 = vmul.f32 %v23, %v44
    %v62 = vmul.f32 %v23, %v48
    %v63 = vmul.f32 %v23, %v52
    %v64 = vmul.f32 %v23, %v56
    %v65 = vmul.f32 %v28, %v44
    %v66 = vmul.f32 %v28, %v48
    %v67 = vmul.f32 %v28, %v52
    %v68 = vmul.f32 %v28, %v56
    %v69 = vmul.f32 %v33, %v44
    %v70 = vmul.f32 %v33, %v48
    %v71 = vmul.f32 %v33, %v52
    %v72 = vmul.f32 %v33, %v56
    %v73 = vmul.f32 %v38, %v44
    %v74 = vmul.f32 %v38, %v48
    %v75 = vmul.f32 %v38, %v52
    %v76 = vmul.f32 %v38, %v56
    %77 = vset.pattern.permute.xlu0 1
    %78 = vperm.xlu0 %77, %v16
    %v79 = vpop.permute.xlu0 %78
    %81 = vset.pattern.permute.xlu0 1
    %82 = vperm.xlu0 %81, %v17
    %v83 = vpop.permute.xlu0 %82
    %85 = vset.pattern.permute.xlu0 1
    %86 = vperm.xlu0 %85, %v18
    %v87 = vpop.permute.xlu0 %86
    %89 = vset.pattern.permute.xlu0 1
    %90 = vperm.xlu0 %89, %v19
    %v91 = vpop.permute.xlu0 %90
    %v93 = vadd.f32 %v61, %v79
    %v94 = vadd.f32 %v62, %v79
    %v95 = vadd.f32 %v63, %v79
    %v96 = vadd.f32 %v64, %v79
    %v97 = vadd.f32 %v65, %v83
    %v98 = vadd.f32 %v66, %v83
    %v99 = vadd.f32 %v67, %v83
    %v100 = vadd.f32 %v68, %v83
    %v101 = vadd.f32 %v69, %v87
    %v102 = vadd.f32 %v70, %v87
    %v103 = vadd.f32 %v71, %v87
    %v104 = vadd.f32 %v72, %v87
    %v105 = vadd.f32 %v73, %v91
    %v106 = vadd.f32 %v74, %v91
    %v107 = vadd.f32 %v75, %v91
    %v108 = vadd.f32 %v76, %v91
    %v109 = vadd.f32 %v93, %v94
    %v110 = vadd.f32 %v109, %v97
    %v111 = vadd.f32 %v110, %v98
    %112 = vadd.xlane.f32.xlu0 %v111
    %v113 = vpop.xlane.xlu0 %112
    %v114 = vrot.slane %v113, 4
    %v115 = vadd.f32 %v113, %v114
    %v116 = vrot.slane %v115, 2
    %v117 = vadd.f32 %v115, %v116
    %v118 = vrot.slane %v117, 1
    %v119 = vadd.f32 %v117, %v118
    %s120 = vtos %v119
    %v121 = vmul.f32 %v93, %v93
    %v122 = vmul.f32 %v94, %v94
    %v123 = vmul.f32 %v97, %v97
    %v124 = vmul.f32 %v98, %v98
    %v125 = vadd.f32 %v121, %v122
    %v126 = vadd.f32 %v125, %v123
    %v127 = vadd.f32 %v126, %v124
    %128 = vadd.xlane.f32.xlu0 %v127
    %v129 = vpop.xlane.xlu0 %128
    %v130 = vrot.slane %v129, 4
    %v131 = vadd.f32 %v129, %v130
    %v132 = vrot.slane %v131, 2
    %v133 = vadd.f32 %v131, %v132
    %v134 = vrot.slane %v133, 1
    %v135 = vadd.f32 %v133, %v134
    %s136 = vtos %v135
    %v137 = vadd.f32 %v101, %v102
    %v138 = vadd.f32 %v137, %v105
    %v139 = vadd.f32 %v138, %v106
    %140 = vadd.xlane.f32.xlu0 %v139
    %v141 = vpop.xlane.xlu0 %140
    %v142 = vrot.slane %v141, 4
    %v143 = vadd.f32 %v141, %v142
    %v144 = vrot.slane %v143, 2
    %v145 = vadd.f32 %v143, %v144
    %v146 = vrot.slane %v145, 1
    %v147 = vadd.f32 %v145, %v146
    %s148 = vtos %v147
    %v149 = vmul.f32 %v101, %v101
    %v150 = vmul.f32 %v102, %v102
    %v151 = vmul.f32 %v105, %v105
    %v152 = vmul.f32 %v106, %v106
    %v153 = vadd.f32 %v149, %v150
    %v154 = vadd.f32 %v153, %v151
    %v155 = vadd.f32 %v154, %v152
    %156 = vadd.xlane.f32.xlu0 %v155
    %v157 = vpop.xlane.xlu0 %156
    %v158 = vrot.slane %v157, 4
    %v159 = vadd.f32 %v157, %v158
    %v160 = vrot.slane %v159, 2
    %v161 = vadd.f32 %v159, %v160
    %v162 = vrot.slane %v161, 1
    %v163 = vadd.f32 %v161, %v162
    %s164 = vtos %v163
    %v165 = vrcp.pop 4096.0
    %s166 = vtos %v165
    %s167 = smul.f32 %s120, %s166
    %v168 = vrcp.pop 4096.0
    %s169 = vtos %v168
    %s170 = smul.f32 %s148, %s169
    %v171 = vrcp.pop 4096.0
    %s172 = vtos %v171
    %s173 = smul.f32 %s136, %s172
    %s174 = smul.f32 %s167, %s167
    %s175 = ssub.f32 %s173, %s174
    %s176 = smax.f32 %s175, 0.0
    %v177 = vrcp.pop 4096.0
    %s178 = vtos %v177
    %s179 = smul.f32 %s164, %s178
    %s180 = smul.f32 %s170, %s170
    %s181 = ssub.f32 %s179, %s180
    %s182 = smax.f32 %s181, 0.0
    %v183 = vstv %s167
    %v184 = vsub.f32 %v93, %v183
    %v185 = vsub.f32 %v94, %v183
    %v186 = vsub.f32 %v97, %v183
    %v187 = vsub.f32 %v98, %v183
    %s188 = sadd.f32 %s176, 1e-05
    %v189 = vstv %s188
    %v190 = vrsqrt.pop %v189
    %s191 = vtos %v190
    %v192 = vstv %s191
    %v193 = vmul.f32 %v184, %v192
    %v194 = vmul.f32 %v185, %v192
    %v195 = vmul.f32 %v186, %v192
    %v196 = vmul.f32 %v187, %v192
    %v197 = vstv %s170
    %v198 = vsub.f32 %v101, %v197
    %v199 = vsub.f32 %v102, %v197
    %v200 = vsub.f32 %v105, %v197
    %v201 = vsub.f32 %v106, %v197
    %s202 = sadd.f32 %s182, 1e-05
    %v203 = vstv %s202
    %v204 = vrsqrt.pop %v203
    %s205 = vtos %v204
    %v206 = vstv %s205
    %v207 = vmul.f32 %v198, %v206
    %v208 = vmul.f32 %v199, %v206
    %v209 = vmul.f32 %v200, %v206
    %v210 = vmul.f32 %v201, %v206
    %v211 = vadd.f32 %v95, %v96
    %v212 = vadd.f32 %v211, %v99
    %v213 = vadd.f32 %v212, %v100
    %214 = vadd.xlane.f32.xlu0 %v213
    %v215 = vpop.xlane.xlu0 %214
    %v216 = vrot.slane %v215, 4
    %v217 = vadd.f32 %v215, %v216
    %v218 = vrot.slane %v217, 2
    %v219 = vadd.f32 %v217, %v218
    %v220 = vrot.slane %v219, 1
    %v221 = vadd.f32 %v219, %v220
    %s222 = vtos %v221
    %v223 = vmul.f32 %v95, %v95
    %v224 = vmul.f32 %v96, %v96
    %v225 = vmul.f32 %v99, %v99
    %v226 = vmul.f32 %v100, %v100
    %v227 = vadd.f32 %v223, %v224
    %v228 = vadd.f32 %v227, %v225
    %v229 = vadd.f32 %v228, %v226
    %230 = vadd.xlane.f32.xlu0 %v229
    %v231 = vpop.xlane.xlu0 %230
    %v232 = vrot.slane %v231, 4
    %v233 = vadd.f32 %v231, %v232
    %v234 = vrot.slane %v233, 2
    %v235 = vadd.f32 %v233, %v234
    %v236 = vrot.slane %v235, 1
    %v237 = vadd.f32 %v235, %v236
    %s238 = vtos %v237
    %v239 = vadd.f32 %v103, %v104
    %v240 = vadd.f32 %v239, %v107
    %v241 = vadd.f32 %v240, %v108
    %242 = vadd.xlane.f32.xlu0 %v241
    %v243 = vpop.xlane.xlu0 %242
    %v244 = vrot.slane %v243, 4
    %v245 = vadd.f32 %v243, %v244
    %v246 = vrot.slane %v245, 2
    %v247 = vadd.f32 %v245, %v246
    %v248 = vrot.slane %v247, 1
    %v249 = vadd.f32 %v247, %v248
    %s250 = vtos %v249
    %v251 = vmul.f32 %v103, %v103
    %v252 = vmul.f32 %v104, %v104
    %v253 = vmul.f32 %v107, %v107
    %v254 = vmul.f32 %v108, %v108
    %v255 = vadd.f32 %v251, %v252
    %v256 = vadd.f32 %v255, %v253
    %v257 = vadd.f32 %v256, %v254
    %258 = vadd.xlane.f32.xlu0 %v257
    %v259 = vpop.xlane.xlu0 %258
    %v260 = vrot.slane %v259, 4
    %v261 = vadd.f32 %v259, %v260
    %v262 = vrot.slane %v261, 2
    %v263 = vadd.f32 %v261, %v262
    %v264 = vrot.slane %v263, 1
    %v265 = vadd.f32 %v263, %v264
    %s266 = vtos %v265
    %v267 = vrcp.pop 4096.0
    %s268 = vtos %v267
    %s269 = smul.f32 %s222, %s268
    %v270 = vrcp.pop 4096.0
    %s271 = vtos %v270
    %s272 = smul.f32 %s250, %s271
    %v273 = vrcp.pop 4096.0
    %s274 = vtos %v273
    %s275 = smul.f32 %s238, %s274
    %s276 = smul.f32 %s269, %s269
    %s277 = ssub.f32 %s275, %s276
    %s278 = smax.f32 %s277, 0.0
    %v279 = vrcp.pop 4096.0
    %s280 = vtos %v279
    %s281 = smul.f32 %s266, %s280
    %s282 = smul.f32 %s272, %s272
    %s283 = ssub.f32 %s281, %s282
    %s284 = smax.f32 %s283, 0.0
    %v285 = vstv %s269
    %v286 = vsub.f32 %v95, %v285
    %v287 = vsub.f32 %v96, %v285
    %v288 = vsub.f32 %v99, %v285
    %v289 = vsub.f32 %v100, %v285
    %s290 = sadd.f32 %s278, 1e-05
    %v291 = vstv %s290
    %v292 = vrsqrt.pop %v291
    %s293 = vtos %v292
    %v294 = vstv %s293
    %v295 = vmul.f32 %v286, %v294
    %v296 = vmul.f32 %v287, %v294
    %v297 = vmul.f32 %v288, %v294
    %v298 = vmul.f32 %v289, %v294
    %v299 = vstv %s272
    %v300 = vsub.f32 %v103, %v299
    %v301 = vsub.f32 %v104, %v299
    %v302 = vsub.f32 %v107, %v299
    %v303 = vsub.f32 %v108, %v299
    %s304 = sadd.f32 %s284, 1e-05
    %v305 = vstv %s304
    %v306 = vrsqrt.pop %v305
    %s307 = vtos %v306
    %v308 = vstv %s307
    %v309 = vmul.f32 %v300, %v308
    %v310 = vmul.f32 %v301, %v308
    %v311 = vmul.f32 %v302, %v308
    %v312 = vmul.f32 %v303, %v308
    %313 = vset.pattern.permute.xlu0 2
    %314 = vperm.xlu0 %313, %v16
    %v315 = vpop.permute.xlu0 %314
    %317 = vset.pattern.permute.xlu0 2
    %318 = vperm.xlu0 %317, %v17
    %v319 = vpop.permute.xlu0 %318
    %321 = vset.pattern.permute.xlu0 2
    %322 = vperm.xlu0 %321, %v18
    %v323 = vpop.permute.xlu0 %322
    %325 = vset.pattern.permute.xlu0 2
    %326 = vperm.xlu0 %325, %v19
    %v327 = vpop.permute.xlu0 %326
    %v329 = vmul.f32 %v193, %v315
    %v330 = vmul.f32 %v194, %v315
    %v331 = vmul.f32 %v295, %v315
    %v332 = vmul.f32 %v296, %v315
    %v333 = vmul.f32 %v195, %v319
    %v334 = vmul.f32 %v196, %v319
    %v335 = vmul.f32 %v297, %v319
    %v336 = vmul.f32 %v298, %v319
    %v337 = vmul.f32 %v207, %v323
    %v338 = vmul.f32 %v208, %v323
    %v339 = vmul.f32 %v309, %v323
    %v340 = vmul.f32 %v310, %v323
    %v341 = vmul.f32 %v209, %v327
    %v342 = vmul.f32 %v210, %v327
    %v343 = vmul.f32 %v311, %v327
    %v344 = vmul.f32 %v312, %v327
    %345 = vset.pattern.permute.xlu0 3
    %346 = vperm.xlu0 %345, %v16
    %v347 = vpop.permute.xlu0 %346
    %349 = vset.pattern.permute.xlu0 3
    %350 = vperm.xlu0 %349, %v17
    %v351 = vpop.permute.xlu0 %350
    %353 = vset.pattern.permute.xlu0 3
    %354 = vperm.xlu0 %353, %v18
    %v355 = vpop.permute.xlu0 %354
    %357 = vset.pattern.permute.xlu0 3
    %358 = vperm.xlu0 %357, %v19
    %v359 = vpop.permute.xlu0 %358
    %v361 = vadd.f32 %v329, %v347
    %v362 = vadd.f32 %v330, %v347
    %v363 = vadd.f32 %v331, %v347
    %v364 = vadd.f32 %v332, %v347
    %v365 = vadd.f32 %v333, %v351
    %v366 = vadd.f32 %v334, %v351
    %v367 = vadd.f32 %v335, %v351
    %v368 = vadd.f32 %v336, %v351
    %v369 = vadd.f32 %v337, %v355
    %v370 = vadd.f32 %v338, %v355
    %v371 = vadd.f32 %v339, %v355
    %v372 = vadd.f32 %v340, %v355
    %v373 = vadd.f32 %v341, %v359
    %v374 = vadd.f32 %v342, %v359
    %v375 = vadd.f32 %v343, %v359
    %v376 = vadd.f32 %v344, %v359
    %vm377 = vcmp.ge.f32.partialorder %v361, 0.0
    %vm378 = vcmp.ge.f32.partialorder %v362, 0.0
    %vm379 = vcmp.ge.f32.partialorder %v363, 0.0
    %vm380 = vcmp.ge.f32.partialorder %v364, 0.0
    %vm381 = vcmp.ge.f32.partialorder %v365, 0.0
    %vm382 = vcmp.ge.f32.partialorder %v366, 0.0
    %vm383 = vcmp.ge.f32.partialorder %v367, 0.0
    %vm384 = vcmp.ge.f32.partialorder %v368, 0.0
    %vm385 = vcmp.ge.f32.partialorder %v369, 0.0
    %vm386 = vcmp.ge.f32.partialorder %v370, 0.0
    %vm387 = vcmp.ge.f32.partialorder %v371, 0.0
    %vm388 = vcmp.ge.f32.partialorder %v372, 0.0
    %vm389 = vcmp.ge.f32.partialorder %v373, 0.0
    %vm390 = vcmp.ge.f32.partialorder %v374, 0.0
    %vm391 = vcmp.ge.f32.partialorder %v375, 0.0
    %vm392 = vcmp.ge.f32.partialorder %v376, 0.0
    %v393 = vmul.f32 %v361, 0.2
    %v394 = vmul.f32 %v362, 0.2
    %v395 = vmul.f32 %v363, 0.2
    %v396 = vmul.f32 %v364, 0.2
    %v397 = vmul.f32 %v365, 0.2
    %v398 = vmul.f32 %v366, 0.2
    %v399 = vmul.f32 %v367, 0.2
    %v400 = vmul.f32 %v368, 0.2
    %v401 = vmul.f32 %v369, 0.2
    %v402 = vmul.f32 %v370, 0.2
    %v403 = vmul.f32 %v371, 0.2
    %v404 = vmul.f32 %v372, 0.2
    %v405 = vmul.f32 %v373, 0.2
    %v406 = vmul.f32 %v374, 0.2
    %v407 = vmul.f32 %v375, 0.2
    %v408 = vmul.f32 %v376, 0.2
    %v409 = vsel %vm377, %v361, %v393
    %v410 = vsel %vm378, %v362, %v394
    %v411 = vsel %vm379, %v363, %v395
    %v412 = vsel %vm380, %v364, %v396
    %v413 = vsel %vm381, %v365, %v397
    %v414 = vsel %vm382, %v366, %v398
    %v415 = vsel %vm383, %v367, %v399
    %v416 = vsel %vm384, %v368, %v400
    %v417 = vsel %vm385, %v369, %v401
    %v418 = vsel %vm386, %v370, %v402
    %v419 = vsel %vm387, %v371, %v403
    %v420 = vsel %vm388, %v372, %v404
    %v421 = vsel %vm389, %v373, %v405
    %v422 = vsel %vm390, %v374, %v406
    %v423 = vsel %vm391, %v375, %v407
    %v424 = vsel %vm392, %v376, %v408
    %v425 = vld [vmem:[%s1] sm:$0xff]
    %v426 = vld [vmem:[%s1 + $0x8] sm:$0xff]
    %v427 = vld [vmem:[%s1 + $0x10] sm:$0xff]
    %v428 = vld [vmem:[%s1 + $0x18] sm:$0xff]
    %429 = vset.pattern.permute.xlu0 4
    %430 = vperm.xlu0 %429, %v16
    %v431 = vpop.permute.xlu0 %430
    %433 = vset.pattern.permute.xlu0 4
    %434 = vperm.xlu0 %433, %v17
    %v435 = vpop.permute.xlu0 %434
    %437 = vset.pattern.permute.xlu0 4
    %438 = vperm.xlu0 %437, %v18
    %v439 = vpop.permute.xlu0 %438
    %441 = vset.pattern.permute.xlu0 4
    %442 = vperm.xlu0 %441, %v19
    %v443 = vpop.permute.xlu0 %442
    %vm445 = vcmask 261120
    %v447 = vsel %vm445, %v425, 0
    %v450 = vsel %vm445, %v426, 0
    %v453 = vsel %vm445, %v427, 0
    %v456 = vsel %vm445, %v428, 0
    %458 = vmatprep.subr.mxu0 0.0
    %459 = vmatpush1.msra.mxu0 0.0
    %460 = vmatprep.subr.mxu0 0.0
    %461 = vmatpush1.msra.mxu0 0.0
    %462 = vmatprep.subr.mxu0 0.0
    %463 = vmatpush1.msra.mxu0 0.0
    %464 = vmatprep.subr.mxu0 0.0
    %465 = vmatpush1.msra.mxu0 0.0
    %466 = vmatprep.subr.mxu0 0.0
    %467 = vmatpush1.msra.mxu0 0.0
    %468 = vmatprep.subr.mxu0 0.0
    %469 = vmatpush1.msra.mxu0 0.0
    %470 = vmatprep.subr.mxu0 0.0
    %471 = vmatpush1.msra.mxu0 0.0
    %472 = vmatprep.subr.mxu0 0.0
    %473 = vmatpush1.msra.mxu0 0.0
    %474 = vmatprep.subr.mxu0 0.0
    %475 = vmatpush1.msra.mxu0 0.0
    %476 = vmatprep.subr.mxu0 0.0
    %477 = vmatpush1.msra.mxu0 0.0
    %478 = vmatprep.subr.mxu0 0.0
    %479 = vmatpush1.msra.mxu0 0.0
    %480 = vmatprep.subr.mxu0 0.0
    %481 = vmatpush1.msra.mxu0 0.0
    %482 = vmatprep.subr.mxu0 %v422
    %483 = vmatpush1.msra.mxu0 %v421
    %484 = vmatprep.subr.mxu0 %v418
    %485 = vmatpush1.msra.mxu0 %v417
    %486 = vmatprep.subr.mxu0 %v414
    %487 = vmatpush1.msra.mxu0 %v413
    %488 = vmatprep.subr.mxu0 %v410
    %489 = vmatpush1.msra.mxu0 %v409
    %490 = vmatprep.subr.mxu0 0.0
    %491 = vmatpush2.msra.mxu0 0.0
    %492 = vmatprep.subr.mxu0 0.0
    %493 = vmatpush2.msra.mxu0 0.0
    %494 = vmatprep.subr.mxu0 0.0
    %495 = vmatpush2.msra.mxu0 0.0
    %496 = vmatprep.subr.mxu0 0.0
    %497 = vmatpush2.msra.mxu0 0.0
    %498 = vmatprep.subr.mxu0 0.0
    %499 = vmatpush2.msra.mxu0 0.0
    %500 = vmatprep.subr.mxu0 0.0
    %501 = vmatpush2.msra.mxu0 0.0
    %502 = vmatprep.subr.mxu0 0.0
    %503 = vmatpush2.msra.mxu0 0.0
    %504 = vmatprep.subr.mxu0 0.0
    %505 = vmatpush2.msra.mxu0 0.0
    %506 = vmatprep.subr.mxu0 0.0
    %507 = vmatpush2.msra.mxu0 0.0
    %508 = vmatprep.subr.mxu0 0.0
    %509 = vmatpush2.msra.mxu0 0.0
    %510 = vmatprep.subr.mxu0 0.0
    %511 = vmatpush2.msra.mxu0 0.0
    %512 = vmatprep.subr.mxu0 0.0
    %513 = vmatpush2.msra.mxu0 0.0
    %514 = vmatprep.subr.mxu0 0.0
    %515 = vmatpush2.msra.mxu0 0.0
    %516 = vmatprep.subr.mxu0 0.0
    %517 = vmatpush2.msra.mxu0 0.0
    %518 = vmatprep.subr.mxu0 0.0
    %519 = vmatpush2.msra.mxu0 0.0
    %520 = vmatprep.subr.mxu0 0.0
    %521 = vmatpush2.msra.mxu0 0.0
    %522 = vmatprep.mubr.f32.mxu0 0.0
    %523 = vmatmul.mubr.f32.gmra.mxu0 %v447
    %v524 = vpop.f32.mrf.mxu0
    %v525 = vadd.f32 %v431, %v524
    %v526 = vpop.f32.mrf.mxu0
    %v527 = vadd.f32 %v431, %v526
    %528 = vmatprep.mubr.f32.mxu0 0.0
    %529 = vmatmul.mubr.f32.gmra.mxu0 %v450
    %v530 = vpop.f32.mrf.mxu0
    %v531 = vadd.f32 %v435, %v530
    %v532 = vpop.f32.mrf.mxu0
    %v533 = vadd.f32 %v435, %v532
    %534 = vmatprep.mubr.f32.mxu0 0.0
    %535 = vmatmul.mubr.f32.gmra.mxu0 %v453
    %v536 = vpop.f32.mrf.mxu0
    %v537 = vadd.f32 %v439, %v536
    %v538 = vpop.f32.mrf.mxu0
    %v539 = vadd.f32 %v439, %v538
    %540 = vmatprep.mubr.f32.mxu0 0.0
    %541 = vmatmul.mubr.f32.gmra.mxu0 %v456
    %v542 = vpop.f32.mrf.mxu0
    %v543 = vadd.f32 %v443, %v542
    %v544 = vpop.f32.mrf.mxu0
    %v545 = vadd.f32 %v443, %v544
    %546 = vdwg.mxu0
    %547 = vmatprep.subr.mxu0 0.0
    %548 = vmatpush1.msra.mxu0 0.0
    %549 = vmatprep.subr.mxu0 0.0
    %550 = vmatpush1.msra.mxu0 0.0
    %551 = vmatprep.subr.mxu0 0.0
    %552 = vmatpush1.msra.mxu0 0.0
    %553 = vmatprep.subr.mxu0 0.0
    %554 = vmatpush1.msra.mxu0 0.0
    %555 = vmatprep.subr.mxu0 0.0
    %556 = vmatpush1.msra.mxu0 0.0
    %557 = vmatprep.subr.mxu0 0.0
    %558 = vmatpush1.msra.mxu0 0.0
    %559 = vmatprep.subr.mxu0 0.0
    %560 = vmatpush1.msra.mxu0 0.0
    %561 = vmatprep.subr.mxu0 0.0
    %562 = vmatpush1.msra.mxu0 0.0
    %563 = vmatprep.subr.mxu0 0.0
    %564 = vmatpush1.msra.mxu0 0.0
    %565 = vmatprep.subr.mxu0 0.0
    %566 = vmatpush1.msra.mxu0 0.0
    %567 = vmatprep.subr.mxu0 0.0
    %568 = vmatpush1.msra.mxu0 0.0
    %569 = vmatprep.subr.mxu0 0.0
    %570 = vmatpush1.msra.mxu0 0.0
    %571 = vmatprep.subr.mxu0 %v424
    %572 = vmatpush1.msra.mxu0 %v423
    %573 = vmatprep.subr.mxu0 %v420
    %574 = vmatpush1.msra.mxu0 %v419
    %575 = vmatprep.subr.mxu0 %v416
    %576 = vmatpush1.msra.mxu0 %v415
    %577 = vmatprep.subr.mxu0 %v412
    %578 = vmatpush1.msra.mxu0 %v411
    %579 = vmatprep.subr.mxu0 0.0
    %580 = vmatpush2.msra.mxu0 0.0
    %581 = vmatprep.subr.mxu0 0.0
    %582 = vmatpush2.msra.mxu0 0.0
    %583 = vmatprep.subr.mxu0 0.0
    %584 = vmatpush2.msra.mxu0 0.0
    %585 = vmatprep.subr.mxu0 0.0
    %586 = vmatpush2.msra.mxu0 0.0
    %587 = vmatprep.subr.mxu0 0.0
    %588 = vmatpush2.msra.mxu0 0.0
    %589 = vmatprep.subr.mxu0 0.0
    %590 = vmatpush2.msra.mxu0 0.0
    %591 = vmatprep.subr.mxu0 0.0
    %592 = vmatpush2.msra.mxu0 0.0
    %593 = vmatprep.subr.mxu0 0.0
    %594 = vmatpush2.msra.mxu0 0.0
    %595 = vmatprep.subr.mxu0 0.0
    %596 = vmatpush2.msra.mxu0 0.0
    %597 = vmatprep.subr.mxu0 0.0
    %598 = vmatpush2.msra.mxu0 0.0
    %599 = vmatprep.subr.mxu0 0.0
    %600 = vmatpush2.msra.mxu0 0.0
    %601 = vmatprep.subr.mxu0 0.0
    %602 = vmatpush2.msra.mxu0 0.0
    %603 = vmatprep.subr.mxu0 0.0
    %604 = vmatpush2.msra.mxu0 0.0
    %605 = vmatprep.subr.mxu0 0.0
    %606 = vmatpush2.msra.mxu0 0.0
    %607 = vmatprep.subr.mxu0 0.0
    %608 = vmatpush2.msra.mxu0 0.0
    %609 = vmatprep.subr.mxu0 0.0
    %610 = vmatpush2.msra.mxu0 0.0
    %611 = vmatprep.mubr.f32.mxu0 0.0
    %612 = vmatmul.mubr.f32.gmra.mxu0 %v447
    %v613 = vpop.f32.mrf.mxu0
    %v614 = vadd.f32 %v431, %v613
    %v615 = vpop.f32.mrf.mxu0
    %v616 = vadd.f32 %v431, %v615
    %617 = vmatprep.mubr.f32.mxu0 0.0
    %618 = vmatmul.mubr.f32.gmra.mxu0 %v450
    %v619 = vpop.f32.mrf.mxu0
    %v620 = vadd.f32 %v435, %v619
    %v621 = vpop.f32.mrf.mxu0
    %v622 = vadd.f32 %v435, %v621
    %623 = vmatprep.mubr.f32.mxu0 0.0
    %624 = vmatmul.mubr.f32.gmra.mxu0 %v453
    %v625 = vpop.f32.mrf.mxu0
    %v626 = vadd.f32 %v439, %v625
    %v627 = vpop.f32.mrf.mxu0
    %v628 = vadd.f32 %v439, %v627
    %629 = vmatprep.mubr.f32.mxu0 0.0
    %630 = vmatmul.mubr.f32.gmra.mxu0 %v456
    %v631 = vpop.f32.mrf.mxu0
    %v632 = vadd.f32 %v443, %v631
    %v633 = vpop.f32.mrf.mxu0
    %v634 = vadd.f32 %v443, %v633
    %635 = vdwg.mxu0
    %v636 = vadd.f32 %v525, %v527
    %v637 = vadd.f32 %v636, %v531
    %v638 = vadd.f32 %v637, %v533
    %639 = vadd.xlane.f32.xlu0 %v638
    %v640 = vpop.xlane.xlu0 %639
    %v641 = vrot.slane %v640, 4
    %v642 = vadd.f32 %v640, %v641
    %v643 = vrot.slane %v642, 2
    %v644 = vadd.f32 %v642, %v643
    %v645 = vrot.slane %v644, 1
    %v646 = vadd.f32 %v644, %v645
    %s647 = vtos %v646
    %v648 = vmul.f32 %v525, %v525
    %v649 = vmul.f32 %v527, %v527
    %v650 = vmul.f32 %v531, %v531
    %v651 = vmul.f32 %v533, %v533
    %v652 = vadd.f32 %v648, %v649
    %v653 = vadd.f32 %v652, %v650
    %v654 = vadd.f32 %v653, %v651
    %655 = vadd.xlane.f32.xlu0 %v654
    %v656 = vpop.xlane.xlu0 %655
    %v657 = vrot.slane %v656, 4
    %v658 = vadd.f32 %v656, %v657
    %v659 = vrot.slane %v658, 2
    %v660 = vadd.f32 %v658, %v659
    %v661 = vrot.slane %v660, 1
    %v662 = vadd.f32 %v660, %v661
    %s663 = vtos %v662
    %v664 = vadd.f32 %v537, %v539
    %v665 = vadd.f32 %v664, %v543
    %v666 = vadd.f32 %v665, %v545
    %667 = vadd.xlane.f32.xlu0 %v666
    %v668 = vpop.xlane.xlu0 %667
    %v669 = vrot.slane %v668, 4
    %v670 = vadd.f32 %v668, %v669
    %v671 = vrot.slane %v670, 2
    %v672 = vadd.f32 %v670, %v671
    %v673 = vrot.slane %v672, 1
    %v674 = vadd.f32 %v672, %v673
    %s675 = vtos %v674
    %v676 = vmul.f32 %v537, %v537
    %v677 = vmul.f32 %v539, %v539
    %v678 = vmul.f32 %v543, %v543
    %v679 = vmul.f32 %v545, %v545
    %v680 = vadd.f32 %v676, %v677
    %v681 = vadd.f32 %v680, %v678
    %v682 = vadd.f32 %v681, %v679
    %683 = vadd.xlane.f32.xlu0 %v682
    %v684 = vpop.xlane.xlu0 %683
    %v685 = vrot.slane %v684, 4
    %v686 = vadd.f32 %v684, %v685
    %v687 = vrot.slane %v686, 2
    %v688 = vadd.f32 %v686, %v687
    %v689 = vrot.slane %v688, 1
    %v690 = vadd.f32 %v688, %v689
    %s691 = vtos %v690
    %v692 = vrcp.pop 4096.0
    %s693 = vtos %v692
    %s694 = smul.f32 %s647, %s693
    %v695 = vrcp.pop 4096.0
    %s696 = vtos %v695
    %s697 = smul.f32 %s675, %s696
    %v698 = vrcp.pop 4096.0
    %s699 = vtos %v698
    %s700 = smul.f32 %s663, %s699
    %s701 = smul.f32 %s694, %s694
    %s702 = ssub.f32 %s700, %s701
    %s703 = smax.f32 %s702, 0.0
    %v704 = vrcp.pop 4096.0
    %s705 = vtos %v704
    %s706 = smul.f32 %s691, %s705
    %s707 = smul.f32 %s697, %s697
    %s708 = ssub.f32 %s706, %s707
    %s709 = smax.f32 %s708, 0.0
    %v710 = vstv %s694
    %v711 = vsub.f32 %v525, %v710
    %v712 = vsub.f32 %v527, %v710
    %v713 = vsub.f32 %v531, %v710
    %v714 = vsub.f32 %v533, %v710
    %s715 = sadd.f32 %s703, 1e-05
    %v716 = vstv %s715
    %v717 = vrsqrt.pop %v716
    %s718 = vtos %v717
    %v719 = vstv %s718
    %v720 = vmul.f32 %v711, %v719
    %v721 = vmul.f32 %v712, %v719
    %v722 = vmul.f32 %v713, %v719
    %v723 = vmul.f32 %v714, %v719
    %v724 = vstv %s697
    %v725 = vsub.f32 %v537, %v724
    %v726 = vsub.f32 %v539, %v724
    %v727 = vsub.f32 %v543, %v724
    %v728 = vsub.f32 %v545, %v724
    %s729 = sadd.f32 %s709, 1e-05
    %v730 = vstv %s729
    %v731 = vrsqrt.pop %v730
    %s732 = vtos %v731
    %v733 = vstv %s732
    %v734 = vmul.f32 %v725, %v733
    %v735 = vmul.f32 %v726, %v733
    %v736 = vmul.f32 %v727, %v733
    %v737 = vmul.f32 %v728, %v733
    %v738 = vadd.f32 %v614, %v616
    %v739 = vadd.f32 %v738, %v620
    %v740 = vadd.f32 %v739, %v622
    %741 = vadd.xlane.f32.xlu0 %v740
    %v742 = vpop.xlane.xlu0 %741
    %v743 = vrot.slane %v742, 4
    %v744 = vadd.f32 %v742, %v743
    %v745 = vrot.slane %v744, 2
    %v746 = vadd.f32 %v744, %v745
    %v747 = vrot.slane %v746, 1
    %v748 = vadd.f32 %v746, %v747
    %s749 = vtos %v748
    %v750 = vmul.f32 %v614, %v614
    %v751 = vmul.f32 %v616, %v616
    %v752 = vmul.f32 %v620, %v620
    %v753 = vmul.f32 %v622, %v622
    %v754 = vadd.f32 %v750, %v751
    %v755 = vadd.f32 %v754, %v752
    %v756 = vadd.f32 %v755, %v753
    %757 = vadd.xlane.f32.xlu0 %v756
    %v758 = vpop.xlane.xlu0 %757
    %v759 = vrot.slane %v758, 4
    %v760 = vadd.f32 %v758, %v759
    %v761 = vrot.slane %v760, 2
    %v762 = vadd.f32 %v760, %v761
    %v763 = vrot.slane %v762, 1
    %v764 = vadd.f32 %v762, %v763
    %s765 = vtos %v764
    %v766 = vadd.f32 %v626, %v628
    %v767 = vadd.f32 %v766, %v632
    %v768 = vadd.f32 %v767, %v634
    %769 = vadd.xlane.f32.xlu0 %v768
    %v770 = vpop.xlane.xlu0 %769
    %v771 = vrot.slane %v770, 4
    %v772 = vadd.f32 %v770, %v771
    %v773 = vrot.slane %v772, 2
    %v774 = vadd.f32 %v772, %v773
    %v775 = vrot.slane %v774, 1
    %v776 = vadd.f32 %v774, %v775
    %s777 = vtos %v776
    %v778 = vmul.f32 %v626, %v626
    %v779 = vmul.f32 %v628, %v628
    %v780 = vmul.f32 %v632, %v632
    %v781 = vmul.f32 %v634, %v634
    %v782 = vadd.f32 %v778, %v779
    %v783 = vadd.f32 %v782, %v780
    %v784 = vadd.f32 %v783, %v781
    %785 = vadd.xlane.f32.xlu0 %v784
    %v786 = vpop.xlane.xlu0 %785
    %v787 = vrot.slane %v786, 4
    %v788 = vadd.f32 %v786, %v787
    %v789 = vrot.slane %v788, 2
    %v790 = vadd.f32 %v788, %v789
    %v791 = vrot.slane %v790, 1
    %v792 = vadd.f32 %v790, %v791
    %s793 = vtos %v792
    %v794 = vrcp.pop 4096.0
    %s795 = vtos %v794
    %s796 = smul.f32 %s749, %s795
    %v797 = vrcp.pop 4096.0
    %s798 = vtos %v797
    %s799 = smul.f32 %s777, %s798
    %v800 = vrcp.pop 4096.0
    %s801 = vtos %v800
    %s802 = smul.f32 %s765, %s801
    %s803 = smul.f32 %s796, %s796
    %s804 = ssub.f32 %s802, %s803
    %s805 = smax.f32 %s804, 0.0
    %v806 = vrcp.pop 4096.0
    %s807 = vtos %v806
    %s808 = smul.f32 %s793, %s807
    %s809 = smul.f32 %s799, %s799
    %s810 = ssub.f32 %s808, %s809
    %s811 = smax.f32 %s810, 0.0
    %v812 = vstv %s796
    %v813 = vsub.f32 %v614, %v812
    %v814 = vsub.f32 %v616, %v812
    %v815 = vsub.f32 %v620, %v812
    %v816 = vsub.f32 %v622, %v812
    %s817 = sadd.f32 %s805, 1e-05
    %v818 = vstv %s817
    %v819 = vrsqrt.pop %v818
    %s820 = vtos %v819
    %v821 = vstv %s820
    %v822 = vmul.f32 %v813, %v821
    %v823 = vmul.f32 %v814, %v821
    %v824 = vmul.f32 %v815, %v821
    %v825 = vmul.f32 %v816, %v821
    %v826 = vstv %s799
    %v827 = vsub.f32 %v626, %v826
    %v828 = vsub.f32 %v628, %v826
    %v829 = vsub.f32 %v632, %v826
    %v830 = vsub.f32 %v634, %v826
    %s831 = sadd.f32 %s811, 1e-05
    %v832 = vstv %s831
    %v833 = vrsqrt.pop %v832
    %s834 = vtos %v833
    %v835 = vstv %s834
    %v836 = vmul.f32 %v827, %v835
    %v837 = vmul.f32 %v828, %v835
    %v838 = vmul.f32 %v829, %v835
    %v839 = vmul.f32 %v830, %v835
    %840 = vset.pattern.permute.xlu0 5
    %841 = vperm.xlu0 %840, %v16
    %v842 = vpop.permute.xlu0 %841
    %844 = vset.pattern.permute.xlu0 5
    %845 = vperm.xlu0 %844, %v17
    %v846 = vpop.permute.xlu0 %845
    %848 = vset.pattern.permute.xlu0 5
    %849 = vperm.xlu0 %848, %v18
    %v850 = vpop.permute.xlu0 %849
    %852 = vset.pattern.permute.xlu0 5
    %853 = vperm.xlu0 %852, %v19
    %v854 = vpop.permute.xlu0 %853
    %v856 = vmul.f32 %v720, %v842
    %v857 = vmul.f32 %v721, %v842
    %v858 = vmul.f32 %v822, %v842
    %v859 = vmul.f32 %v823, %v842
    %v860 = vmul.f32 %v722, %v846
    %v861 = vmul.f32 %v723, %v846
    %v862 = vmul.f32 %v824, %v846
    %v863 = vmul.f32 %v825, %v846
    %v864 = vmul.f32 %v734, %v850
    %v865 = vmul.f32 %v735, %v850
    %v866 = vmul.f32 %v836, %v850
    %v867 = vmul.f32 %v837, %v850
    %v868 = vmul.f32 %v736, %v854
    %v869 = vmul.f32 %v737, %v854
    %v870 = vmul.f32 %v838, %v854
    %v871 = vmul.f32 %v839, %v854
    %872 = vset.pattern.permute.xlu0 6
    %873 = vperm.xlu0 %872, %v16
    %v874 = vpop.permute.xlu0 %873
    %876 = vset.pattern.permute.xlu0 6
    %877 = vperm.xlu0 %876, %v17
    %v878 = vpop.permute.xlu0 %877
    %880 = vset.pattern.permute.xlu0 6
    %881 = vperm.xlu0 %880, %v18
    %v882 = vpop.permute.xlu0 %881
    %884 = vset.pattern.permute.xlu0 6
    %885 = vperm.xlu0 %884, %v19
    %v886 = vpop.permute.xlu0 %885
    %v888 = vadd.f32 %v856, %v874
    %v889 = vadd.f32 %v857, %v874
    %v890 = vadd.f32 %v858, %v874
    %v891 = vadd.f32 %v859, %v874
    %v892 = vadd.f32 %v860, %v878
    %v893 = vadd.f32 %v861, %v878
    %v894 = vadd.f32 %v862, %v878
    %v895 = vadd.f32 %v863, %v878
    %v896 = vadd.f32 %v864, %v882
    %v897 = vadd.f32 %v865, %v882
    %v898 = vadd.f32 %v866, %v882
    %v899 = vadd.f32 %v867, %v882
    %v900 = vadd.f32 %v868, %v886
    %v901 = vadd.f32 %v869, %v886
    %v902 = vadd.f32 %v870, %v886
    %v903 = vadd.f32 %v871, %v886
    %vm904 = vcmp.ge.f32.partialorder %v888, 0.0
    %vm905 = vcmp.ge.f32.partialorder %v889, 0.0
    %vm906 = vcmp.ge.f32.partialorder %v890, 0.0
    %vm907 = vcmp.ge.f32.partialorder %v891, 0.0
    %vm908 = vcmp.ge.f32.partialorder %v892, 0.0
    %vm909 = vcmp.ge.f32.partialorder %v893, 0.0
    %vm910 = vcmp.ge.f32.partialorder %v894, 0.0
    %vm911 = vcmp.ge.f32.partialorder %v895, 0.0
    %vm912 = vcmp.ge.f32.partialorder %v896, 0.0
    %vm913 = vcmp.ge.f32.partialorder %v897, 0.0
    %vm914 = vcmp.ge.f32.partialorder %v898, 0.0
    %vm915 = vcmp.ge.f32.partialorder %v899, 0.0
    %vm916 = vcmp.ge.f32.partialorder %v900, 0.0
    %vm917 = vcmp.ge.f32.partialorder %v901, 0.0
    %vm918 = vcmp.ge.f32.partialorder %v902, 0.0
    %vm919 = vcmp.ge.f32.partialorder %v903, 0.0
    %v920 = vmul.f32 %v888, 0.2
    %v921 = vmul.f32 %v889, 0.2
    %v922 = vmul.f32 %v890, 0.2
    %v923 = vmul.f32 %v891, 0.2
    %v924 = vmul.f32 %v892, 0.2
    %v925 = vmul.f32 %v893, 0.2
    %v926 = vmul.f32 %v894, 0.2
    %v927 = vmul.f32 %v895, 0.2
    %v928 = vmul.f32 %v896, 0.2
    %v929 = vmul.f32 %v897, 0.2
    %v930 = vmul.f32 %v898, 0.2
    %v931 = vmul.f32 %v899, 0.2
    %v932 = vmul.f32 %v900, 0.2
    %v933 = vmul.f32 %v901, 0.2
    %v934 = vmul.f32 %v902, 0.2
    %v935 = vmul.f32 %v903, 0.2
    %v936 = vsel %vm904, %v888, %v920
    %v937 = vsel %vm905, %v889, %v921
    %v938 = vsel %vm906, %v890, %v922
    %v939 = vsel %vm907, %v891, %v923
    %v940 = vsel %vm908, %v892, %v924
    %v941 = vsel %vm909, %v893, %v925
    %v942 = vsel %vm910, %v894, %v926
    %v943 = vsel %vm911, %v895, %v927
    %v944 = vsel %vm912, %v896, %v928
    %v945 = vsel %vm913, %v897, %v929
    %v946 = vsel %vm914, %v898, %v930
    %v947 = vsel %vm915, %v899, %v931
    %v948 = vsel %vm916, %v900, %v932
    %v949 = vsel %vm917, %v901, %v933
    %v950 = vsel %vm918, %v902, %v934
    %v951 = vsel %vm919, %v903, %v935
    %v952 = vld [vmem:[%s1 + $0x20] sm:$0xff]
    %v953 = vld [vmem:[%s1 + $0x28] sm:$0xff]
    %v954 = vld [vmem:[%s1 + $0x30] sm:$0xff]
    %v955 = vld [vmem:[%s1 + $0x38] sm:$0xff]
    %956 = vset.pattern.permute.xlu0 7
    %957 = vperm.xlu0 %956, %v16
    %v958 = vpop.permute.xlu0 %957
    %960 = vset.pattern.permute.xlu0 7
    %961 = vperm.xlu0 %960, %v17
    %v962 = vpop.permute.xlu0 %961
    %964 = vset.pattern.permute.xlu0 7
    %965 = vperm.xlu0 %964, %v18
    %v966 = vpop.permute.xlu0 %965
    %968 = vset.pattern.permute.xlu0 7
    %969 = vperm.xlu0 %968, %v19
    %v970 = vpop.permute.xlu0 %969
    %v973 = vsel %vm445, %v952, 0
    %v976 = vsel %vm445, %v953, 0
    %v979 = vsel %vm445, %v954, 0
    %v982 = vsel %vm445, %v955, 0
    %984 = vmatprep.subr.mxu0 0.0
    %985 = vmatpush1.msra.mxu0 0.0
    %986 = vmatprep.subr.mxu0 0.0
    %987 = vmatpush1.msra.mxu0 0.0
    %988 = vmatprep.subr.mxu0 0.0
    %989 = vmatpush1.msra.mxu0 0.0
    %990 = vmatprep.subr.mxu0 0.0
    %991 = vmatpush1.msra.mxu0 0.0
    %992 = vmatprep.subr.mxu0 0.0
    %993 = vmatpush1.msra.mxu0 0.0
    %994 = vmatprep.subr.mxu0 0.0
    %995 = vmatpush1.msra.mxu0 0.0
    %996 = vmatprep.subr.mxu0 0.0
    %997 = vmatpush1.msra.mxu0 0.0
    %998 = vmatprep.subr.mxu0 0.0
    %999 = vmatpush1.msra.mxu0 0.0
    %1000 = vmatprep.subr.mxu0 0.0
    %1001 = vmatpush1.msra.mxu0 0.0
    %1002 = vmatprep.subr.mxu0 0.0
    %1003 = vmatpush1.msra.mxu0 0.0
    %1004 = vmatprep.subr.mxu0 0.0
    %1005 = vmatpush1.msra.mxu0 0.0
    %1006 = vmatprep.subr.mxu0 0.0
    %1007 = vmatpush1.msra.mxu0 0.0
    %1008 = vmatprep.subr.mxu0 %v949
    %1009 = vmatpush1.msra.mxu0 %v948
    %1010 = vmatprep.subr.mxu0 %v945
    %1011 = vmatpush1.msra.mxu0 %v944
    %1012 = vmatprep.subr.mxu0 %v941
    %1013 = vmatpush1.msra.mxu0 %v940
    %1014 = vmatprep.subr.mxu0 %v937
    %1015 = vmatpush1.msra.mxu0 %v936
    %1016 = vmatprep.subr.mxu0 0.0
    %1017 = vmatpush2.msra.mxu0 0.0
    %1018 = vmatprep.subr.mxu0 0.0
    %1019 = vmatpush2.msra.mxu0 0.0
    %1020 = vmatprep.subr.mxu0 0.0
    %1021 = vmatpush2.msra.mxu0 0.0
    %1022 = vmatprep.subr.mxu0 0.0
    %1023 = vmatpush2.msra.mxu0 0.0
    %1024 = vmatprep.subr.mxu0 0.0
    %1025 = vmatpush2.msra.mxu0 0.0
    %1026 = vmatprep.subr.mxu0 0.0
    %1027 = vmatpush2.msra.mxu0 0.0
    %1028 = vmatprep.subr.mxu0 0.0
    %1029 = vmatpush2.msra.mxu0 0.0
    %1030 = vmatprep.subr.mxu0 0.0
    %1031 = vmatpush2.msra.mxu0 0.0
    %1032 = vmatprep.subr.mxu0 0.0
    %1033 = vmatpush2.msra.mxu0 0.0
    %1034 = vmatprep.subr.mxu0 0.0
    %1035 = vmatpush2.msra.mxu0 0.0
    %1036 = vmatprep.subr.mxu0 0.0
    %1037 = vmatpush2.msra.mxu0 0.0
    %1038 = vmatprep.subr.mxu0 0.0
    %1039 = vmatpush2.msra.mxu0 0.0
    %1040 = vmatprep.subr.mxu0 0.0
    %1041 = vmatpush2.msra.mxu0 0.0
    %1042 = vmatprep.subr.mxu0 0.0
    %1043 = vmatpush2.msra.mxu0 0.0
    %1044 = vmatprep.subr.mxu0 0.0
    %1045 = vmatpush2.msra.mxu0 0.0
    %1046 = vmatprep.subr.mxu0 0.0
    %1047 = vmatpush2.msra.mxu0 0.0
    %1048 = vmatprep.mubr.f32.mxu0 0.0
    %1049 = vmatmul.mubr.f32.gmra.mxu0 %v973
    %v1050 = vpop.f32.mrf.mxu0
    %v1051 = vadd.f32 %v958, %v1050
    %v1052 = vpop.f32.mrf.mxu0
    %v1053 = vadd.f32 %v958, %v1052
    %1054 = vmatprep.mubr.f32.mxu0 0.0
    %1055 = vmatmul.mubr.f32.gmra.mxu0 %v976
    %v1056 = vpop.f32.mrf.mxu0
    %v1057 = vadd.f32 %v962, %v1056
    %v1058 = vpop.f32.mrf.mxu0
    %v1059 = vadd.f32 %v962, %v1058
    %1060 = vmatprep.mubr.f32.mxu0 0.0
    %1061 = vmatmul.mubr.f32.gmra.mxu0 %v979
    %v1062 = vpop.f32.mrf.mxu0
    %v1063 = vadd.f32 %v966, %v1062
    %v1064 = vpop.f32.mrf.mxu0
    %v1065 = vadd.f32 %v966, %v1064
    %1066 = vmatprep.mubr.f32.mxu0 0.0
    %1067 = vmatmul.mubr.f32.gmra.mxu0 %v982
    %v1068 = vpop.f32.mrf.mxu0
    %v1069 = vadd.f32 %v970, %v1068
    %v1070 = vpop.f32.mrf.mxu0
    %v1071 = vadd.f32 %v970, %v1070
    %1072 = vdwg.mxu0
    %1073 = vmatprep.subr.mxu0 0.0
    %1074 = vmatpush1.msra.mxu0 0.0
    %1075 = vmatprep.subr.mxu0 0.0
    %1076 = vmatpush1.msra.mxu0 0.0
    %1077 = vmatprep.subr.mxu0 0.0
    %1078 = vmatpush1.msra.mxu0 0.0
    %1079 = vmatprep.subr.mxu0 0.0
    %1080 = vmatpush1.msra.mxu0 0.0
    %1081 = vmatprep.subr.mxu0 0.0
    %1082 = vmatpush1.msra.mxu0 0.0
    %1083 = vmatprep.subr.mxu0 0.0
    %1084 = vmatpush1.msra.mxu0 0.0
    %1085 = vmatprep.subr.mxu0 0.0
    %1086 = vmatpush1.msra.mxu0 0.0
    %1087 = vmatprep.subr.mxu0 0.0
    %1088 = vmatpush1.msra.mxu0 0.0
    %1089 = vmatprep.subr.mxu0 0.0
    %1090 = vmatpush1.msra.mxu0 0.0
    %1091 = vmatprep.subr.mxu0 0.0
    %1092 = vmatpush1.msra.mxu0 0.0
    %1093 = vmatprep.subr.mxu0 0.0
    %1094 = vmatpush1.msra.mxu0 0.0
    %1095 = vmatprep.subr.mxu0 0.0
    %1096 = vmatpush1.msra.mxu0 0.0
    %1097 = vmatprep.subr.mxu0 %v951
    %1098 = vmatpush1.msra.mxu0 %v950
    %1099 = vmatprep.subr.mxu0 %v947
    %1100 = vmatpush1.msra.mxu0 %v946
    %1101 = vmatprep.subr.mxu0 %v943
    %1102 = vmatpush1.msra.mxu0 %v942
    %1103 = vmatprep.subr.mxu0 %v939
    %1104 = vmatpush1.msra.mxu0 %v938
    %1105 = vmatprep.subr.mxu0 0.0
    %1106 = vmatpush2.msra.mxu0 0.0
    %1107 = vmatprep.subr.mxu0 0.0
    %1108 = vmatpush2.msra.mxu0 0.0
    %1109 = vmatprep.subr.mxu0 0.0
    %1110 = vmatpush2.msra.mxu0 0.0
    %1111 = vmatprep.subr.mxu0 0.0
    %1112 = vmatpush2.msra.mxu0 0.0
    %1113 = vmatprep.subr.mxu0 0.0
    %1114 = vmatpush2.msra.mxu0 0.0
    %1115 = vmatprep.subr.mxu0 0.0
    %1116 = vmatpush2.msra.mxu0 0.0
    %1117 = vmatprep.subr.mxu0 0.0
    %1118 = vmatpush2.msra.mxu0 0.0
    %1119 = vmatprep.subr.mxu0 0.0
    %1120 = vmatpush2.msra.mxu0 0.0
    %1121 = vmatprep.subr.mxu0 0.0
    %1122 = vmatpush2.msra.mxu0 0.0
    %1123 = vmatprep.subr.mxu0 0.0
    %1124 = vmatpush2.msra.mxu0 0.0
    %1125 = vmatprep.subr.mxu0 0.0
    %1126 = vmatpush2.msra.mxu0 0.0
    %1127 = vmatprep.subr.mxu0 0.0
    %1128 = vmatpush2.msra.mxu0 0.0
    %1129 = vmatprep.subr.mxu0 0.0
    %1130 = vmatpush2.msra.mxu0 0.0
    %1131 = vmatprep.subr.mxu0 0.0
    %1132 = vmatpush2.msra.mxu0 0.0
    %1133 = vmatprep.subr.mxu0 0.0
    %1134 = vmatpush2.msra.mxu0 0.0
    %1135 = vmatprep.subr.mxu0 0.0
    %1136 = vmatpush2.msra.mxu0 0.0
    %1137 = vmatprep.mubr.f32.mxu0 0.0
    %1138 = vmatmul.mubr.f32.gmra.mxu0 %v973
    %v1139 = vpop.f32.mrf.mxu0
    %v1140 = vadd.f32 %v958, %v1139
    %v1141 = vpop.f32.mrf.mxu0
    %v1142 = vadd.f32 %v958, %v1141
    %1143 = vmatprep.mubr.f32.mxu0 0.0
    %1144 = vmatmul.mubr.f32.gmra.mxu0 %v976
    %v1145 = vpop.f32.mrf.mxu0
    %v1146 = vadd.f32 %v962, %v1145
    %v1147 = vpop.f32.mrf.mxu0
    %v1148 = vadd.f32 %v962, %v1147
    %1149 = vmatprep.mubr.f32.mxu0 0.0
    %1150 = vmatmul.mubr.f32.gmra.mxu0 %v979
    %v1151 = vpop.f32.mrf.mxu0
    %v1152 = vadd.f32 %v966, %v1151
    %v1153 = vpop.f32.mrf.mxu0
    %v1154 = vadd.f32 %v966, %v1153
    %1155 = vmatprep.mubr.f32.mxu0 0.0
    %1156 = vmatmul.mubr.f32.gmra.mxu0 %v982
    %v1157 = vpop.f32.mrf.mxu0
    %v1158 = vadd.f32 %v970, %v1157
    %v1159 = vpop.f32.mrf.mxu0
    %v1160 = vadd.f32 %v970, %v1159
    %1161 = vdwg.mxu0
    %v1162 = vadd.f32 %v1051, %v1053
    %v1163 = vadd.f32 %v1162, %v1057
    %v1164 = vadd.f32 %v1163, %v1059
    %1165 = vadd.xlane.f32.xlu0 %v1164
    %v1166 = vpop.xlane.xlu0 %1165
    %v1167 = vrot.slane %v1166, 4
    %v1168 = vadd.f32 %v1166, %v1167
    %v1169 = vrot.slane %v1168, 2
    %v1170 = vadd.f32 %v1168, %v1169
    %v1171 = vrot.slane %v1170, 1
    %v1172 = vadd.f32 %v1170, %v1171
    %s1173 = vtos %v1172
    %v1174 = vmul.f32 %v1051, %v1051
    %v1175 = vmul.f32 %v1053, %v1053
    %v1176 = vmul.f32 %v1057, %v1057
    %v1177 = vmul.f32 %v1059, %v1059
    %v1178 = vadd.f32 %v1174, %v1175
    %v1179 = vadd.f32 %v1178, %v1176
    %v1180 = vadd.f32 %v1179, %v1177
    %1181 = vadd.xlane.f32.xlu0 %v1180
    %v1182 = vpop.xlane.xlu0 %1181
    %v1183 = vrot.slane %v1182, 4
    %v1184 = vadd.f32 %v1182, %v1183
    %v1185 = vrot.slane %v1184, 2
    %v1186 = vadd.f32 %v1184, %v1185
    %v1187 = vrot.slane %v1186, 1
    %v1188 = vadd.f32 %v1186, %v1187
    %s1189 = vtos %v1188
    %v1190 = vadd.f32 %v1063, %v1065
    %v1191 = vadd.f32 %v1190, %v1069
    %v1192 = vadd.f32 %v1191, %v1071
    %1193 = vadd.xlane.f32.xlu0 %v1192
    %v1194 = vpop.xlane.xlu0 %1193
    %v1195 = vrot.slane %v1194, 4
    %v1196 = vadd.f32 %v1194, %v1195
    %v1197 = vrot.slane %v1196, 2
    %v1198 = vadd.f32 %v1196, %v1197
    %v1199 = vrot.slane %v1198, 1
    %v1200 = vadd.f32 %v1198, %v1199
    %s1201 = vtos %v1200
    %v1202 = vmul.f32 %v1063, %v1063
    %v1203 = vmul.f32 %v1065, %v1065
    %v1204 = vmul.f32 %v1069, %v1069
    %v1205 = vmul.f32 %v1071, %v1071
    %v1206 = vadd.f32 %v1202, %v1203
    %v1207 = vadd.f32 %v1206, %v1204
    %v1208 = vadd.f32 %v1207, %v1205
    %1209 = vadd.xlane.f32.xlu0 %v1208
    %v1210 = vpop.xlane.xlu0 %1209
    %v1211 = vrot.slane %v1210, 4
    %v1212 = vadd.f32 %v1210, %v1211
    %v1213 = vrot.slane %v1212, 2
    %v1214 = vadd.f32 %v1212, %v1213
    %v1215 = vrot.slane %v1214, 1
    %v1216 = vadd.f32 %v1214, %v1215
    %s1217 = vtos %v1216
    %v1218 = vrcp.pop 4096.0
    %s1219 = vtos %v1218
    %s1220 = smul.f32 %s1173, %s1219
    %v1221 = vrcp.pop 4096.0
    %s1222 = vtos %v1221
    %s1223 = smul.f32 %s1201, %s1222
    %v1224 = vrcp.pop 4096.0
    %s1225 = vtos %v1224
    %s1226 = smul.f32 %s1189, %s1225
    %s1227 = smul.f32 %s1220, %s1220
    %s1228 = ssub.f32 %s1226, %s1227
    %s1229 = smax.f32 %s1228, 0.0
    %v1230 = vrcp.pop 4096.0
    %s1231 = vtos %v1230
    %s1232 = smul.f32 %s1217, %s1231
    %s1233 = smul.f32 %s1223, %s1223
    %s1234 = ssub.f32 %s1232, %s1233
    %s1235 = smax.f32 %s1234, 0.0
    %v1236 = vstv %s1220
    %v1237 = vsub.f32 %v1051, %v1236
    %v1238 = vsub.f32 %v1053, %v1236
    %v1239 = vsub.f32 %v1057, %v1236
    %v1240 = vsub.f32 %v1059, %v1236
    %s1241 = sadd.f32 %s1229, 1e-05
    %v1242 = vstv %s1241
    %v1243 = vrsqrt.pop %v1242
    %s1244 = vtos %v1243
    %v1245 = vstv %s1244
    %v1246 = vmul.f32 %v1237, %v1245
    %v1247 = vmul.f32 %v1238, %v1245
    %v1248 = vmul.f32 %v1239, %v1245
    %v1249 = vmul.f32 %v1240, %v1245
    %v1250 = vstv %s1223
    %v1251 = vsub.f32 %v1063, %v1250
    %v1252 = vsub.f32 %v1065, %v1250
    %v1253 = vsub.f32 %v1069, %v1250
    %v1254 = vsub.f32 %v1071, %v1250
    %s1255 = sadd.f32 %s1235, 1e-05
    %v1256 = vstv %s1255
    %v1257 = vrsqrt.pop %v1256
    %s1258 = vtos %v1257
    %v1259 = vstv %s1258
    %v1260 = vmul.f32 %v1251, %v1259
    %v1261 = vmul.f32 %v1252, %v1259
    %v1262 = vmul.f32 %v1253, %v1259
    %v1263 = vmul.f32 %v1254, %v1259
    %v1264 = vadd.f32 %v1140, %v1142
    %v1265 = vadd.f32 %v1264, %v1146
    %v1266 = vadd.f32 %v1265, %v1148
    %1267 = vadd.xlane.f32.xlu0 %v1266
    %v1268 = vpop.xlane.xlu0 %1267
    %v1269 = vrot.slane %v1268, 4
    %v1270 = vadd.f32 %v1268, %v1269
    %v1271 = vrot.slane %v1270, 2
    %v1272 = vadd.f32 %v1270, %v1271
    %v1273 = vrot.slane %v1272, 1
    %v1274 = vadd.f32 %v1272, %v1273
    %s1275 = vtos %v1274
    %v1276 = vmul.f32 %v1140, %v1140
    %v1277 = vmul.f32 %v1142, %v1142
    %v1278 = vmul.f32 %v1146, %v1146
    %v1279 = vmul.f32 %v1148, %v1148
    %v1280 = vadd.f32 %v1276, %v1277
    %v1281 = vadd.f32 %v1280, %v1278
    %v1282 = vadd.f32 %v1281, %v1279
    %1283 = vadd.xlane.f32.xlu0 %v1282
    %v1284 = vpop.xlane.xlu0 %1283
    %v1285 = vrot.slane %v1284, 4
    %v1286 = vadd.f32 %v1284, %v1285
    %v1287 = vrot.slane %v1286, 2
    %v1288 = vadd.f32 %v1286, %v1287
    %v1289 = vrot.slane %v1288, 1
    %v1290 = vadd.f32 %v1288, %v1289
    %s1291 = vtos %v1290
    %v1292 = vadd.f32 %v1152, %v1154
    %v1293 = vadd.f32 %v1292, %v1158
    %v1294 = vadd.f32 %v1293, %v1160
    %1295 = vadd.xlane.f32.xlu0 %v1294
    %v1296 = vpop.xlane.xlu0 %1295
    %v1297 = vrot.slane %v1296, 4
    %v1298 = vadd.f32 %v1296, %v1297
    %v1299 = vrot.slane %v1298, 2
    %v1300 = vadd.f32 %v1298, %v1299
    %v1301 = vrot.slane %v1300, 1
    %v1302 = vadd.f32 %v1300, %v1301
    %s1303 = vtos %v1302
    %v1304 = vmul.f32 %v1152, %v1152
    %v1305 = vmul.f32 %v1154, %v1154
    %v1306 = vmul.f32 %v1158, %v1158
    %v1307 = vmul.f32 %v1160, %v1160
    %v1308 = vadd.f32 %v1304, %v1305
    %v1309 = vadd.f32 %v1308, %v1306
    %v1310 = vadd.f32 %v1309, %v1307
    %1311 = vadd.xlane.f32.xlu0 %v1310
    %v1312 = vpop.xlane.xlu0 %1311
    %v1313 = vrot.slane %v1312, 4
    %v1314 = vadd.f32 %v1312, %v1313
    %v1315 = vrot.slane %v1314, 2
    %v1316 = vadd.f32 %v1314, %v1315
    %v1317 = vrot.slane %v1316, 1
    %v1318 = vadd.f32 %v1316, %v1317
    %s1319 = vtos %v1318
    %v1320 = vrcp.pop 4096.0
    %s1321 = vtos %v1320
    %s1322 = smul.f32 %s1275, %s1321
    %v1323 = vrcp.pop 4096.0
    %s1324 = vtos %v1323
    %s1325 = smul.f32 %s1303, %s1324
    %v1326 = vrcp.pop 4096.0
    %s1327 = vtos %v1326
    %s1328 = smul.f32 %s1291, %s1327
    %s1329 = smul.f32 %s1322, %s1322
    %s1330 = ssub.f32 %s1328, %s1329
    %s1331 = smax.f32 %s1330, 0.0
    %v1332 = vrcp.pop 4096.0
    %s1333 = vtos %v1332
    %s1334 = smul.f32 %s1319, %s1333
    %s1335 = smul.f32 %s1325, %s1325
    %s1336 = ssub.f32 %s1334, %s1335
    %s1337 = smax.f32 %s1336, 0.0
    %v1338 = vstv %s1322
    %v1339 = vsub.f32 %v1140, %v1338
    %v1340 = vsub.f32 %v1142, %v1338
    %v1341 = vsub.f32 %v1146, %v1338
    %v1342 = vsub.f32 %v1148, %v1338
    %s1343 = sadd.f32 %s1331, 1e-05
    %v1344 = vstv %s1343
    %v1345 = vrsqrt.pop %v1344
    %s1346 = vtos %v1345
    %v1347 = vstv %s1346
    %v1348 = vmul.f32 %v1339, %v1347
    %v1349 = vmul.f32 %v1340, %v1347
    %v1350 = vmul.f32 %v1341, %v1347
    %v1351 = vmul.f32 %v1342, %v1347
    %v1352 = vstv %s1325
    %v1353 = vsub.f32 %v1152, %v1352
    %v1354 = vsub.f32 %v1154, %v1352
    %v1355 = vsub.f32 %v1158, %v1352
    %v1356 = vsub.f32 %v1160, %v1352
    %s1357 = sadd.f32 %s1337, 1e-05
    %v1358 = vstv %s1357
    %v1359 = vrsqrt.pop %v1358
    %s1360 = vtos %v1359
    %v1361 = vstv %s1360
    %v1362 = vmul.f32 %v1353, %v1361
    %v1363 = vmul.f32 %v1354, %v1361
    %v1364 = vmul.f32 %v1355, %v1361
    %v1365 = vmul.f32 %v1356, %v1361
    %1366 = vset.pattern.permute.xlu0 8
    %1367 = vperm.xlu0 %1366, %v16
    %v1368 = vpop.permute.xlu0 %1367
    %1370 = vset.pattern.permute.xlu0 8
    %1371 = vperm.xlu0 %1370, %v17
    %v1372 = vpop.permute.xlu0 %1371
    %1374 = vset.pattern.permute.xlu0 8
    %1375 = vperm.xlu0 %1374, %v18
    %v1376 = vpop.permute.xlu0 %1375
    %1378 = vset.pattern.permute.xlu0 8
    %1379 = vperm.xlu0 %1378, %v19
    %v1380 = vpop.permute.xlu0 %1379
    %v1382 = vmul.f32 %v1246, %v1368
    %v1383 = vmul.f32 %v1247, %v1368
    %v1384 = vmul.f32 %v1348, %v1368
    %v1385 = vmul.f32 %v1349, %v1368
    %v1386 = vmul.f32 %v1248, %v1372
    %v1387 = vmul.f32 %v1249, %v1372
    %v1388 = vmul.f32 %v1350, %v1372
    %v1389 = vmul.f32 %v1351, %v1372
    %v1390 = vmul.f32 %v1260, %v1376
    %v1391 = vmul.f32 %v1261, %v1376
    %v1392 = vmul.f32 %v1362, %v1376
    %v1393 = vmul.f32 %v1363, %v1376
    %v1394 = vmul.f32 %v1262, %v1380
    %v1395 = vmul.f32 %v1263, %v1380
    %v1396 = vmul.f32 %v1364, %v1380
    %v1397 = vmul.f32 %v1365, %v1380
    %1398 = vset.pattern.permute.xlu0 9
    %1399 = vperm.xlu0 %1398, %v16
    %v1400 = vpop.permute.xlu0 %1399
    %1402 = vset.pattern.permute.xlu0 9
    %1403 = vperm.xlu0 %1402, %v17
    %v1404 = vpop.permute.xlu0 %1403
    %1406 = vset.pattern.permute.xlu0 9
    %1407 = vperm.xlu0 %1406, %v18
    %v1408 = vpop.permute.xlu0 %1407
    %1410 = vset.pattern.permute.xlu0 9
    %1411 = vperm.xlu0 %1410, %v19
    %v1412 = vpop.permute.xlu0 %1411
    %v1414 = vadd.f32 %v1382, %v1400
    %v1415 = vadd.f32 %v1383, %v1400
    %v1416 = vadd.f32 %v1384, %v1400
    %v1417 = vadd.f32 %v1385, %v1400
    %v1418 = vadd.f32 %v1386, %v1404
    %v1419 = vadd.f32 %v1387, %v1404
    %v1420 = vadd.f32 %v1388, %v1404
    %v1421 = vadd.f32 %v1389, %v1404
    %v1422 = vadd.f32 %v1390, %v1408
    %v1423 = vadd.f32 %v1391, %v1408
    %v1424 = vadd.f32 %v1392, %v1408
    %v1425 = vadd.f32 %v1393, %v1408
    %v1426 = vadd.f32 %v1394, %v1412
    %v1427 = vadd.f32 %v1395, %v1412
    %v1428 = vadd.f32 %v1396, %v1412
    %v1429 = vadd.f32 %v1397, %v1412
    %vm1430 = vcmp.ge.f32.partialorder %v1414, 0.0
    %vm1431 = vcmp.ge.f32.partialorder %v1415, 0.0
    %vm1432 = vcmp.ge.f32.partialorder %v1416, 0.0
    %vm1433 = vcmp.ge.f32.partialorder %v1417, 0.0
    %vm1434 = vcmp.ge.f32.partialorder %v1418, 0.0
    %vm1435 = vcmp.ge.f32.partialorder %v1419, 0.0
    %vm1436 = vcmp.ge.f32.partialorder %v1420, 0.0
    %vm1437 = vcmp.ge.f32.partialorder %v1421, 0.0
    %vm1438 = vcmp.ge.f32.partialorder %v1422, 0.0
    %vm1439 = vcmp.ge.f32.partialorder %v1423, 0.0
    %vm1440 = vcmp.ge.f32.partialorder %v1424, 0.0
    %vm1441 = vcmp.ge.f32.partialorder %v1425, 0.0
    %vm1442 = vcmp.ge.f32.partialorder %v1426, 0.0
    %vm1443 = vcmp.ge.f32.partialorder %v1427, 0.0
    %vm1444 = vcmp.ge.f32.partialorder %v1428, 0.0
    %vm1445 = vcmp.ge.f32.partialorder %v1429, 0.0
    %v1446 = vmul.f32 %v1414, 0.2
    %v1447 = vmul.f32 %v1415, 0.2
    %v1448 = vmul.f32 %v1416, 0.2
    %v1449 = vmul.f32 %v1417, 0.2
    %v1450 = vmul.f32 %v1418, 0.2
    %v1451 = vmul.f32 %v1419, 0.2
    %v1452 = vmul.f32 %v1420, 0.2
    %v1453 = vmul.f32 %v1421, 0.2
    %v1454 = vmul.f32 %v1422, 0.2
    %v1455 = vmul.f32 %v1423, 0.2
    %v1456 = vmul.f32 %v1424, 0.2
    %v1457 = vmul.f32 %v1425, 0.2
    %v1458 = vmul.f32 %v1426, 0.2
    %v1459 = vmul.f32 %v1427, 0.2
    %v1460 = vmul.f32 %v1428, 0.2
    %v1461 = vmul.f32 %v1429, 0.2
    %v1462 = vsel %vm1430, %v1414, %v1446
    %v1463 = vsel %vm1431, %v1415, %v1447
    %v1464 = vsel %vm1432, %v1416, %v1448
    %v1465 = vsel %vm1433, %v1417, %v1449
    %v1466 = vsel %vm1434, %v1418, %v1450
    %v1467 = vsel %vm1435, %v1419, %v1451
    %v1468 = vsel %vm1436, %v1420, %v1452
    %v1469 = vsel %vm1437, %v1421, %v1453
    %v1470 = vsel %vm1438, %v1422, %v1454
    %v1471 = vsel %vm1439, %v1423, %v1455
    %v1472 = vsel %vm1440, %v1424, %v1456
    %v1473 = vsel %vm1441, %v1425, %v1457
    %v1474 = vsel %vm1442, %v1426, %v1458
    %v1475 = vsel %vm1443, %v1427, %v1459
    %v1476 = vsel %vm1444, %v1428, %v1460
    %v1477 = vsel %vm1445, %v1429, %v1461
    %v1478 = vld [vmem:[%s1 + $0x40] sm:$0xff]
    %v1479 = vld [vmem:[%s1 + $0x48] sm:$0xff]
    %v1480 = vld [vmem:[%s1 + $0x50] sm:$0xff]
    %v1481 = vld [vmem:[%s1 + $0x58] sm:$0xff]
    %1482 = vset.pattern.permute.xlu0 10
    %1483 = vperm.xlu0 %1482, %v16
    %v1484 = vpop.permute.xlu0 %1483
    %1486 = vset.pattern.permute.xlu0 10
    %1487 = vperm.xlu0 %1486, %v17
    %v1488 = vpop.permute.xlu0 %1487
    %1490 = vset.pattern.permute.xlu0 10
    %1491 = vperm.xlu0 %1490, %v18
    %v1492 = vpop.permute.xlu0 %1491
    %1494 = vset.pattern.permute.xlu0 10
    %1495 = vperm.xlu0 %1494, %v19
    %v1496 = vpop.permute.xlu0 %1495
    %v1499 = vsel %vm445, %v1478, 0
    %v1502 = vsel %vm445, %v1479, 0
    %v1505 = vsel %vm445, %v1480, 0
    %v1508 = vsel %vm445, %v1481, 0
    %1510 = vmatprep.subr.mxu0 0.0
    %1511 = vmatpush1.msra.mxu0 0.0
    %1512 = vmatprep.subr.mxu0 0.0
    %1513 = vmatpush1.msra.mxu0 0.0
    %1514 = vmatprep.subr.mxu0 0.0
    %1515 = vmatpush1.msra.mxu0 0.0
    %1516 = vmatprep.subr.mxu0 0.0
    %1517 = vmatpush1.msra.mxu0 0.0
    %1518 = vmatprep.subr.mxu0 0.0
    %1519 = vmatpush1.msra.mxu0 0.0
    %1520 = vmatprep.subr.mxu0 0.0
    %1521 = vmatpush1.msra.mxu0 0.0
    %1522 = vmatprep.subr.mxu0 0.0
    %1523 = vmatpush1.msra.mxu0 0.0
    %1524 = vmatprep.subr.mxu0 0.0
    %1525 = vmatpush1.msra.mxu0 0.0
    %1526 = vmatprep.subr.mxu0 0.0
    %1527 = vmatpush1.msra.mxu0 0.0
    %1528 = vmatprep.subr.mxu0 0.0
    %1529 = vmatpush1.msra.mxu0 0.0
    %1530 = vmatprep.subr.mxu0 0.0
    %1531 = vmatpush1.msra.mxu0 0.0
    %1532 = vmatprep.subr.mxu0 0.0
    %1533 = vmatpush1.msra.mxu0 0.0
    %1534 = vmatprep.subr.mxu0 %v1475
    %1535 = vmatpush1.msra.mxu0 %v1474
    %1536 = vmatprep.subr.mxu0 %v1471
    %1537 = vmatpush1.msra.mxu0 %v1470
    %1538 = vmatprep.subr.mxu0 %v1467
    %1539 = vmatpush1.msra.mxu0 %v1466
    %1540 = vmatprep.subr.mxu0 %v1463
    %1541 = vmatpush1.msra.mxu0 %v1462
    %1542 = vmatprep.subr.mxu0 0.0
    %1543 = vmatpush2.msra.mxu0 0.0
    %1544 = vmatprep.subr.mxu0 0.0
    %1545 = vmatpush2.msra.mxu0 0.0
    %1546 = vmatprep.subr.mxu0 0.0
    %1547 = vmatpush2.msra.mxu0 0.0
    %1548 = vmatprep.subr.mxu0 0.0
    %1549 = vmatpush2.msra.mxu0 0.0
    %1550 = vmatprep.subr.mxu0 0.0
    %1551 = vmatpush2.msra.mxu0 0.0
    %1552 = vmatprep.subr.mxu0 0.0
    %1553 = vmatpush2.msra.mxu0 0.0
    %1554 = vmatprep.subr.mxu0 0.0
    %1555 = vmatpush2.msra.mxu0 0.0
    %1556 = vmatprep.subr.mxu0 0.0
    %1557 = vmatpush2.msra.mxu0 0.0
    %1558 = vmatprep.subr.mxu0 0.0
    %1559 = vmatpush2.msra.mxu0 0.0
    %1560 = vmatprep.subr.mxu0 0.0
    %1561 = vmatpush2.msra.mxu0 0.0
    %1562 = vmatprep.subr.mxu0 0.0
    %1563 = vmatpush2.msra.mxu0 0.0
    %1564 = vmatprep.subr.mxu0 0.0
    %1565 = vmatpush2.msra.mxu0 0.0
    %1566 = vmatprep.subr.mxu0 0.0
    %1567 = vmatpush2.msra.mxu0 0.0
    %1568 = vmatprep.subr.mxu0 0.0
    %1569 = vmatpush2.msra.mxu0 0.0
    %1570 = vmatprep.subr.mxu0 0.0
    %1571 = vmatpush2.msra.mxu0 0.0
    %1572 = vmatprep.subr.mxu0 0.0
    %1573 = vmatpush2.msra.mxu0 0.0
    %1574 = vmatprep.mubr.f32.mxu0 0.0
    %1575 = vmatmul.mubr.f32.gmra.mxu0 %v1499
    %v1576 = vpop.f32.mrf.mxu0
    %v1577 = vadd.f32 %v1484, %v1576
    %v1578 = vpop.f32.mrf.mxu0
    %v1579 = vadd.f32 %v1484, %v1578
    %1580 = vmatprep.mubr.f32.mxu0 0.0
    %1581 = vmatmul.mubr.f32.gmra.mxu0 %v1502
    %v1582 = vpop.f32.mrf.mxu0
    %v1583 = vadd.f32 %v1488, %v1582
    %v1584 = vpop.f32.mrf.mxu0
    %v1585 = vadd.f32 %v1488, %v1584
    %1586 = vmatprep.mubr.f32.mxu0 0.0
    %1587 = vmatmul.mubr.f32.gmra.mxu0 %v1505
    %v1588 = vpop.f32.mrf.mxu0
    %v1589 = vadd.f32 %v1492, %v1588
    %v1590 = vpop.f32.mrf.mxu0
    %v1591 = vadd.f32 %v1492, %v1590
    %1592 = vmatprep.mubr.f32.mxu0 0.0
    %1593 = vmatmul.mubr.f32.gmra.mxu0 %v1508
    %v1594 = vpop.f32.mrf.mxu0
    %v1595 = vadd.f32 %v1496, %v1594
    %v1596 = vpop.f32.mrf.mxu0
    %v1597 = vadd.f32 %v1496, %v1596
    %1598 = vdwg.mxu0
    %1599 = vmatprep.subr.mxu0 0.0
    %1600 = vmatpush1.msra.mxu0 0.0
    %1601 = vmatprep.subr.mxu0 0.0
    %1602 = vmatpush1.msra.mxu0 0.0
    %1603 = vmatprep.subr.mxu0 0.0
    %1604 = vmatpush1.msra.mxu0 0.0
    %1605 = vmatprep.subr.mxu0 0.0
    %1606 = vmatpush1.msra.mxu0 0.0
    %1607 = vmatprep.subr.mxu0 0.0
    %1608 = vmatpush1.msra.mxu0 0.0
    %1609 = vmatprep.subr.mxu0 0.0
    %1610 = vmatpush1.msra.mxu0 0.0
    %1611 = vmatprep.subr.mxu0 0.0
    %1612 = vmatpush1.msra.mxu0 0.0
    %1613 = vmatprep.subr.mxu0 0.0
    %1614 = vmatpush1.msra.mxu0 0.0
    %1615 = vmatprep.subr.mxu0 0.0
    %1616 = vmatpush1.msra.mxu0 0.0
    %1617 = vmatprep.subr.mxu0 0.0
    %1618 = vmatpush1.msra.mxu0 0.0
    %1619 = vmatprep.subr.mxu0 0.0
    %1620 = vmatpush1.msra.mxu0 0.0
    %1621 = vmatprep.subr.mxu0 0.0
    %1622 = vmatpush1.msra.mxu0 0.0
    %1623 = vmatprep.subr.mxu0 %v1477
    %1624 = vmatpush1.msra.mxu0 %v1476
    %1625 = vmatprep.subr.mxu0 %v1473
    %1626 = vmatpush1.msra.mxu0 %v1472
    %1627 = vmatprep.subr.mxu0 %v1469
    %1628 = vmatpush1.msra.mxu0 %v1468
    %1629 = vmatprep.subr.mxu0 %v1465
    %1630 = vmatpush1.msra.mxu0 %v1464
    %1631 = vmatprep.subr.mxu0 0.0
    %1632 = vmatpush2.msra.mxu0 0.0
    %1633 = vmatprep.subr.mxu0 0.0
    %1634 = vmatpush2.msra.mxu0 0.0
    %1635 = vmatprep.subr.mxu0 0.0
    %1636 = vmatpush2.msra.mxu0 0.0
    %1637 = vmatprep.subr.mxu0 0.0
    %1638 = vmatpush2.msra.mxu0 0.0
    %1639 = vmatprep.subr.mxu0 0.0
    %1640 = vmatpush2.msra.mxu0 0.0
    %1641 = vmatprep.subr.mxu0 0.0
    %1642 = vmatpush2.msra.mxu0 0.0
    %1643 = vmatprep.subr.mxu0 0.0
    %1644 = vmatpush2.msra.mxu0 0.0
    %1645 = vmatprep.subr.mxu0 0.0
    %1646 = vmatpush2.msra.mxu0 0.0
    %1647 = vmatprep.subr.mxu0 0.0
    %1648 = vmatpush2.msra.mxu0 0.0
    %1649 = vmatprep.subr.mxu0 0.0
    %1650 = vmatpush2.msra.mxu0 0.0
    %1651 = vmatprep.subr.mxu0 0.0
    %1652 = vmatpush2.msra.mxu0 0.0
    %1653 = vmatprep.subr.mxu0 0.0
    %1654 = vmatpush2.msra.mxu0 0.0
    %1655 = vmatprep.subr.mxu0 0.0
    %1656 = vmatpush2.msra.mxu0 0.0
    %1657 = vmatprep.subr.mxu0 0.0
    %1658 = vmatpush2.msra.mxu0 0.0
    %1659 = vmatprep.subr.mxu0 0.0
    %1660 = vmatpush2.msra.mxu0 0.0
    %1661 = vmatprep.subr.mxu0 0.0
    %1662 = vmatpush2.msra.mxu0 0.0
    %1663 = vmatprep.mubr.f32.mxu0 0.0
    %1664 = vmatmul.mubr.f32.gmra.mxu0 %v1499
    %v1665 = vpop.f32.mrf.mxu0
    %v1666 = vadd.f32 %v1484, %v1665
    %v1667 = vpop.f32.mrf.mxu0
    %v1668 = vadd.f32 %v1484, %v1667
    %1669 = vmatprep.mubr.f32.mxu0 0.0
    %1670 = vmatmul.mubr.f32.gmra.mxu0 %v1502
    %v1671 = vpop.f32.mrf.mxu0
    %v1672 = vadd.f32 %v1488, %v1671
    %v1673 = vpop.f32.mrf.mxu0
    %v1674 = vadd.f32 %v1488, %v1673
    %1675 = vmatprep.mubr.f32.mxu0 0.0
    %1676 = vmatmul.mubr.f32.gmra.mxu0 %v1505
    %v1677 = vpop.f32.mrf.mxu0
    %v1678 = vadd.f32 %v1492, %v1677
    %v1679 = vpop.f32.mrf.mxu0
    %v1680 = vadd.f32 %v1492, %v1679
    %1681 = vmatprep.mubr.f32.mxu0 0.0
    %1682 = vmatmul.mubr.f32.gmra.mxu0 %v1508
    %v1683 = vpop.f32.mrf.mxu0
    %v1684 = vadd.f32 %v1496, %v1683
    %v1685 = vpop.f32.mrf.mxu0
    %v1686 = vadd.f32 %v1496, %v1685
    %1687 = vdwg.mxu0
    %v1688 = vadd.f32 %v1577, %v1579
    %v1689 = vadd.f32 %v1688, %v1583
    %v1690 = vadd.f32 %v1689, %v1585
    %1691 = vadd.xlane.f32.xlu0 %v1690
    %v1692 = vpop.xlane.xlu0 %1691
    %v1693 = vrot.slane %v1692, 4
    %v1694 = vadd.f32 %v1692, %v1693
    %v1695 = vrot.slane %v1694, 2
    %v1696 = vadd.f32 %v1694, %v1695
    %v1697 = vrot.slane %v1696, 1
    %v1698 = vadd.f32 %v1696, %v1697
    %s1699 = vtos %v1698
    %v1700 = vmul.f32 %v1577, %v1577
    %v1701 = vmul.f32 %v1579, %v1579
    %v1702 = vmul.f32 %v1583, %v1583
    %v1703 = vmul.f32 %v1585, %v1585
    %v1704 = vadd.f32 %v1700, %v1701
    %v1705 = vadd.f32 %v1704, %v1702
    %v1706 = vadd.f32 %v1705, %v1703
    %1707 = vadd.xlane.f32.xlu0 %v1706
    %v1708 = vpop.xlane.xlu0 %1707
    %v1709 = vrot.slane %v1708, 4
    %v1710 = vadd.f32 %v1708, %v1709
    %v1711 = vrot.slane %v1710, 2
    %v1712 = vadd.f32 %v1710, %v1711
    %v1713 = vrot.slane %v1712, 1
    %v1714 = vadd.f32 %v1712, %v1713
    %s1715 = vtos %v1714
    %v1716 = vadd.f32 %v1589, %v1591
    %v1717 = vadd.f32 %v1716, %v1595
    %v1718 = vadd.f32 %v1717, %v1597
    %1719 = vadd.xlane.f32.xlu0 %v1718
    %v1720 = vpop.xlane.xlu0 %1719
    %v1721 = vrot.slane %v1720, 4
    %v1722 = vadd.f32 %v1720, %v1721
    %v1723 = vrot.slane %v1722, 2
    %v1724 = vadd.f32 %v1722, %v1723
    %v1725 = vrot.slane %v1724, 1
    %v1726 = vadd.f32 %v1724, %v1725
    %s1727 = vtos %v1726
    %v1728 = vmul.f32 %v1589, %v1589
    %v1729 = vmul.f32 %v1591, %v1591
    %v1730 = vmul.f32 %v1595, %v1595
    %v1731 = vmul.f32 %v1597, %v1597
    %v1732 = vadd.f32 %v1728, %v1729
    %v1733 = vadd.f32 %v1732, %v1730
    %v1734 = vadd.f32 %v1733, %v1731
    %1735 = vadd.xlane.f32.xlu0 %v1734
    %v1736 = vpop.xlane.xlu0 %1735
    %v1737 = vrot.slane %v1736, 4
    %v1738 = vadd.f32 %v1736, %v1737
    %v1739 = vrot.slane %v1738, 2
    %v1740 = vadd.f32 %v1738, %v1739
    %v1741 = vrot.slane %v1740, 1
    %v1742 = vadd.f32 %v1740, %v1741
    %s1743 = vtos %v1742
    %v1744 = vrcp.pop 4096.0
    %s1745 = vtos %v1744
    %s1746 = smul.f32 %s1699, %s1745
    %v1747 = vrcp.pop 4096.0
    %s1748 = vtos %v1747
    %s1749 = smul.f32 %s1727, %s1748
    %v1750 = vrcp.pop 4096.0
    %s1751 = vtos %v1750
    %s1752 = smul.f32 %s1715, %s1751
    %s1753 = smul.f32 %s1746, %s1746
    %s1754 = ssub.f32 %s1752, %s1753
    %s1755 = smax.f32 %s1754, 0.0
    %v1756 = vrcp.pop 4096.0
    %s1757 = vtos %v1756
    %s1758 = smul.f32 %s1743, %s1757
    %s1759 = smul.f32 %s1749, %s1749
    %s1760 = ssub.f32 %s1758, %s1759
    %s1761 = smax.f32 %s1760, 0.0
    %v1762 = vstv %s1746
    %v1763 = vsub.f32 %v1577, %v1762
    %v1764 = vsub.f32 %v1579, %v1762
    %v1765 = vsub.f32 %v1583, %v1762
    %v1766 = vsub.f32 %v1585, %v1762
    %s1767 = sadd.f32 %s1755, 1e-05
    %v1768 = vstv %s1767
    %v1769 = vrsqrt.pop %v1768
    %s1770 = vtos %v1769
    %v1771 = vstv %s1770
    %v1772 = vmul.f32 %v1763, %v1771
    %v1773 = vmul.f32 %v1764, %v1771
    %v1774 = vmul.f32 %v1765, %v1771
    %v1775 = vmul.f32 %v1766, %v1771
    %v1776 = vstv %s1749
    %v1777 = vsub.f32 %v1589, %v1776
    %v1778 = vsub.f32 %v1591, %v1776
    %v1779 = vsub.f32 %v1595, %v1776
    %v1780 = vsub.f32 %v1597, %v1776
    %s1781 = sadd.f32 %s1761, 1e-05
    %v1782 = vstv %s1781
    %v1783 = vrsqrt.pop %v1782
    %s1784 = vtos %v1783
    %v1785 = vstv %s1784
    %v1786 = vmul.f32 %v1777, %v1785
    %v1787 = vmul.f32 %v1778, %v1785
    %v1788 = vmul.f32 %v1779, %v1785
    %v1789 = vmul.f32 %v1780, %v1785
    %v1790 = vadd.f32 %v1666, %v1668
    %v1791 = vadd.f32 %v1790, %v1672
    %v1792 = vadd.f32 %v1791, %v1674
    %1793 = vadd.xlane.f32.xlu0 %v1792
    %v1794 = vpop.xlane.xlu0 %1793
    %v1795 = vrot.slane %v1794, 4
    %v1796 = vadd.f32 %v1794, %v1795
    %v1797 = vrot.slane %v1796, 2
    %v1798 = vadd.f32 %v1796, %v1797
    %v1799 = vrot.slane %v1798, 1
    %v1800 = vadd.f32 %v1798, %v1799
    %s1801 = vtos %v1800
    %v1802 = vmul.f32 %v1666, %v1666
    %v1803 = vmul.f32 %v1668, %v1668
    %v1804 = vmul.f32 %v1672, %v1672
    %v1805 = vmul.f32 %v1674, %v1674
    %v1806 = vadd.f32 %v1802, %v1803
    %v1807 = vadd.f32 %v1806, %v1804
    %v1808 = vadd.f32 %v1807, %v1805
    %1809 = vadd.xlane.f32.xlu0 %v1808
    %v1810 = vpop.xlane.xlu0 %1809
    %v1811 = vrot.slane %v1810, 4
    %v1812 = vadd.f32 %v1810, %v1811
    %v1813 = vrot.slane %v1812, 2
    %v1814 = vadd.f32 %v1812, %v1813
    %v1815 = vrot.slane %v1814, 1
    %v1816 = vadd.f32 %v1814, %v1815
    %s1817 = vtos %v1816
    %v1818 = vadd.f32 %v1678, %v1680
    %v1819 = vadd.f32 %v1818, %v1684
    %v1820 = vadd.f32 %v1819, %v1686
    %1821 = vadd.xlane.f32.xlu0 %v1820
    %v1822 = vpop.xlane.xlu0 %1821
    %v1823 = vrot.slane %v1822, 4
    %v1824 = vadd.f32 %v1822, %v1823
    %v1825 = vrot.slane %v1824, 2
    %v1826 = vadd.f32 %v1824, %v1825
    %v1827 = vrot.slane %v1826, 1
    %v1828 = vadd.f32 %v1826, %v1827
    %s1829 = vtos %v1828
    %v1830 = vmul.f32 %v1678, %v1678
    %v1831 = vmul.f32 %v1680, %v1680
    %v1832 = vmul.f32 %v1684, %v1684
    %v1833 = vmul.f32 %v1686, %v1686
    %v1834 = vadd.f32 %v1830, %v1831
    %v1835 = vadd.f32 %v1834, %v1832
    %v1836 = vadd.f32 %v1835, %v1833
    %1837 = vadd.xlane.f32.xlu0 %v1836
    %v1838 = vpop.xlane.xlu0 %1837
    %v1839 = vrot.slane %v1838, 4
    %v1840 = vadd.f32 %v1838, %v1839
    %v1841 = vrot.slane %v1840, 2
    %v1842 = vadd.f32 %v1840, %v1841
    %v1843 = vrot.slane %v1842, 1
    %v1844 = vadd.f32 %v1842, %v1843
    %s1845 = vtos %v1844
    %v1846 = vrcp.pop 4096.0
    %s1847 = vtos %v1846
    %s1848 = smul.f32 %s1801, %s1847
    %v1849 = vrcp.pop 4096.0
    %s1850 = vtos %v1849
    %s1851 = smul.f32 %s1829, %s1850
    %v1852 = vrcp.pop 4096.0
    %s1853 = vtos %v1852
    %s1854 = smul.f32 %s1817, %s1853
    %s1855 = smul.f32 %s1848, %s1848
    %s1856 = ssub.f32 %s1854, %s1855
    %s1857 = smax.f32 %s1856, 0.0
    %v1858 = vrcp.pop 4096.0
    %s1859 = vtos %v1858
    %s1860 = smul.f32 %s1845, %s1859
    %s1861 = smul.f32 %s1851, %s1851
    %s1862 = ssub.f32 %s1860, %s1861
    %s1863 = smax.f32 %s1862, 0.0
    %v1864 = vstv %s1848
    %v1865 = vsub.f32 %v1666, %v1864
    %v1866 = vsub.f32 %v1668, %v1864
    %v1867 = vsub.f32 %v1672, %v1864
    %v1868 = vsub.f32 %v1674, %v1864
    %s1869 = sadd.f32 %s1857, 1e-05
    %v1870 = vstv %s1869
    %v1871 = vrsqrt.pop %v1870
    %s1872 = vtos %v1871
    %v1873 = vstv %s1872
    %v1874 = vmul.f32 %v1865, %v1873
    %v1875 = vmul.f32 %v1866, %v1873
    %v1876 = vmul.f32 %v1867, %v1873
    %v1877 = vmul.f32 %v1868, %v1873
    %v1878 = vstv %s1851
    %v1879 = vsub.f32 %v1678, %v1878
    %v1880 = vsub.f32 %v1680, %v1878
    %v1881 = vsub.f32 %v1684, %v1878
    %v1882 = vsub.f32 %v1686, %v1878
    %s1883 = sadd.f32 %s1863, 1e-05
    %v1884 = vstv %s1883
    %v1885 = vrsqrt.pop %v1884
    %s1886 = vtos %v1885
    %v1887 = vstv %s1886
    %v1888 = vmul.f32 %v1879, %v1887
    %v1889 = vmul.f32 %v1880, %v1887
    %v1890 = vmul.f32 %v1881, %v1887
    %v1891 = vmul.f32 %v1882, %v1887
    %1892 = vset.pattern.permute.xlu0 11
    %1893 = vperm.xlu0 %1892, %v16
    %v1894 = vpop.permute.xlu0 %1893
    %1896 = vset.pattern.permute.xlu0 11
    %1897 = vperm.xlu0 %1896, %v17
    %v1898 = vpop.permute.xlu0 %1897
    %1900 = vset.pattern.permute.xlu0 11
    %1901 = vperm.xlu0 %1900, %v18
    %v1902 = vpop.permute.xlu0 %1901
    %1904 = vset.pattern.permute.xlu0 11
    %1905 = vperm.xlu0 %1904, %v19
    %v1906 = vpop.permute.xlu0 %1905
    %v1908 = vmul.f32 %v1772, %v1894
    %v1909 = vmul.f32 %v1773, %v1894
    %v1910 = vmul.f32 %v1874, %v1894
    %v1911 = vmul.f32 %v1875, %v1894
    %v1912 = vmul.f32 %v1774, %v1898
    %v1913 = vmul.f32 %v1775, %v1898
    %v1914 = vmul.f32 %v1876, %v1898
    %v1915 = vmul.f32 %v1877, %v1898
    %v1916 = vmul.f32 %v1786, %v1902
    %v1917 = vmul.f32 %v1787, %v1902
    %v1918 = vmul.f32 %v1888, %v1902
    %v1919 = vmul.f32 %v1889, %v1902
    %v1920 = vmul.f32 %v1788, %v1906
    %v1921 = vmul.f32 %v1789, %v1906
    %v1922 = vmul.f32 %v1890, %v1906
    %v1923 = vmul.f32 %v1891, %v1906
    %1924 = vset.pattern.permute.xlu0 12
    %1925 = vperm.xlu0 %1924, %v16
    %v1926 = vpop.permute.xlu0 %1925
    %1928 = vset.pattern.permute.xlu0 12
    %1929 = vperm.xlu0 %1928, %v17
    %v1930 = vpop.permute.xlu0 %1929
    %1932 = vset.pattern.permute.xlu0 12
    %1933 = vperm.xlu0 %1932, %v18
    %v1934 = vpop.permute.xlu0 %1933
    %1936 = vset.pattern.permute.xlu0 12
    %1937 = vperm.xlu0 %1936, %v19
    %v1938 = vpop.permute.xlu0 %1937
    %v1940 = vadd.f32 %v1908, %v1926
    %v1941 = vadd.f32 %v1909, %v1926
    %v1942 = vadd.f32 %v1910, %v1926
    %v1943 = vadd.f32 %v1911, %v1926
    %v1944 = vadd.f32 %v1912, %v1930
    %v1945 = vadd.f32 %v1913, %v1930
    %v1946 = vadd.f32 %v1914, %v1930
    %v1947 = vadd.f32 %v1915, %v1930
    %v1948 = vadd.f32 %v1916, %v1934
    %v1949 = vadd.f32 %v1917, %v1934
    %v1950 = vadd.f32 %v1918, %v1934
    %v1951 = vadd.f32 %v1919, %v1934
    %v1952 = vadd.f32 %v1920, %v1938
    %v1953 = vadd.f32 %v1921, %v1938
    %v1954 = vadd.f32 %v1922, %v1938
    %v1955 = vadd.f32 %v1923, %v1938
    %v1956 = vmax.f32 %v1940, 0.0
    %v1957 = vmax.f32 %v1941, 0.0
    %v1958 = vmax.f32 %v1942, 0.0
    %v1959 = vmax.f32 %v1943, 0.0
    %v1960 = vmax.f32 %v1944, 0.0
    %v1961 = vmax.f32 %v1945, 0.0
    %v1962 = vmax.f32 %v1946, 0.0
    %v1963 = vmax.f32 %v1947, 0.0
    %v1964 = vmax.f32 %v1948, 0.0
    %v1965 = vmax.f32 %v1949, 0.0
    %v1966 = vmax.f32 %v1950, 0.0
    %v1967 = vmax.f32 %v1951, 0.0
    %v1968 = vmax.f32 %v1952, 0.0
    %v1969 = vmax.f32 %v1953, 0.0
    %v1970 = vmax.f32 %v1954, 0.0
    %v1971 = vmax.f32 %v1955, 0.0
    %1972 = vset.pattern.permute.xlu0 13
    %1973 = vperm.xlu0 %1972, %v16
    %v1974 = vpop.permute.xlu0 %1973
    %1976 = vset.pattern.permute.xlu0 13
    %1977 = vperm.xlu0 %1976, %v17
    %v1978 = vpop.permute.xlu0 %1977
    %1980 = vset.pattern.permute.xlu0 13
    %1981 = vperm.xlu0 %1980, %v18
    %v1982 = vpop.permute.xlu0 %1981
    %1984 = vset.pattern.permute.xlu0 13
    %1985 = vperm.xlu0 %1984, %v19
    %v1986 = vpop.permute.xlu0 %1985
    %v1988 = vmul.f32 %v1974, %v1956
    %v1989 = vmul.f32 %v1974, %v1957
    %v1990 = vmul.f32 %v1974, %v1958
    %v1991 = vmul.f32 %v1974, %v1959
    %v1992 = vmul.f32 %v1978, %v1960
    %v1993 = vmul.f32 %v1978, %v1961
    %v1994 = vmul.f32 %v1978, %v1962
    %v1995 = vmul.f32 %v1978, %v1963
    %v1996 = vmul.f32 %v1982, %v1964
    %v1997 = vmul.f32 %v1982, %v1965
    %v1998 = vmul.f32 %v1982, %v1966
    %v1999 = vmul.f32 %v1982, %v1967
    %v2000 = vmul.f32 %v1986, %v1968
    %v2001 = vmul.f32 %v1986, %v1969
    %v2002 = vmul.f32 %v1986, %v1970
    %v2003 = vmul.f32 %v1986, %v1971
    %v2004 = vadd.f32 %v1988, %v1992
    %v2005 = vadd.f32 %v2004, %v1996
    %v2006 = vadd.f32 %v2005, %v2000
    %v2007 = vrot.slane %v2006, 4
    %v2008 = vadd.f32 %v2006, %v2007
    %v2009 = vrot.slane %v2008, 2
    %v2010 = vadd.f32 %v2008, %v2009
    %v2011 = vrot.slane %v2010, 1
    %v2012 = vadd.f32 %v2010, %v2011
    %v2013 = vadd.f32 %v1989, %v1993
    %v2014 = vadd.f32 %v2013, %v1997
    %v2015 = vadd.f32 %v2014, %v2001
    %v2016 = vrot.slane %v2015, 4
    %v2017 = vadd.f32 %v2015, %v2016
    %v2018 = vrot.slane %v2017, 2
    %v2019 = vadd.f32 %v2017, %v2018
    %v2020 = vrot.slane %v2019, 1
    %v2021 = vadd.f32 %v2019, %v2020
    %v2022 = vadd.f32 %v1990, %v1994
    %v2023 = vadd.f32 %v2022, %v1998
    %v2024 = vadd.f32 %v2023, %v2002
    %v2025 = vrot.slane %v2024, 4
    %v2026 = vadd.f32 %v2024, %v2025
    %v2027 = vrot.slane %v2026, 2
    %v2028 = vadd.f32 %v2026, %v2027
    %v2029 = vrot.slane %v2028, 1
    %v2030 = vadd.f32 %v2028, %v2029
    %v2031 = vadd.f32 %v1991, %v1995
    %v2032 = vadd.f32 %v2031, %v1999
    %v2033 = vadd.f32 %v2032, %v2003
    %v2034 = vrot.slane %v2033, 4
    %v2035 = vadd.f32 %v2033, %v2034
    %v2036 = vrot.slane %v2035, 2
    %v2037 = vadd.f32 %v2035, %v2036
    %v2038 = vrot.slane %v2037, 1
    %v2039 = vadd.f32 %v2037, %v2038
    %2040 = vset.pattern.permute.xlu0 14
    %2041 = vperm.xlu0 %2040, %v16
    %v2042 = vpop.permute.xlu0 %2041
    %v2044 = vadd.f32 %v2012, %v2042
    %v2045 = vadd.f32 %v2021, %v2042
    %v2046 = vadd.f32 %v2030, %v2042
    %v2047 = vadd.f32 %v2039, %v2042
    %v2052 = vcombine.low %v2044, %v2045
    %v2053 = vcombine.low %v2046, %v2047
    %v2055 = vunpack.c.l.s4 1966171168
    %v2056 = vunpack.c.0.s8 %v2055
    %v2057 = vlaneseq
    %v2058 = vshrl.u32 %v2057, 7
    %v2059 = vsub.s32 %v2056, %v2058
    %v2060 = vrot.slane %v2052, %v2059
    %v2062 = vunpack.c.l.s4 1966171168
    %v2063 = vunpack.c.0.s8 %v2062
    %v2064 = vlaneseq
    %v2065 = vshrl.u32 %v2064, 7
    %v2066 = vsub.s32 %v2063, %v2065
    %v2067 = vrot.slane %v2053, %v2066
    %v2068 = vcombine.low %v2060, %v2067
    %v2070 = vunpack.c.l.s4 1966171168
    %v2071 = vunpack.c.0.s8 %v2070
    %v2072 = vlaneseq
    %v2073 = vshrl.u32 %v2072, 7
    %v2074 = vsub.s32 %v2071, %v2073
    %v2075 = vrot.slane %v2068, %v2074
    %v2077 = vsub.f32 %v15, %v2075
    %v2078 = vlaneseq
    %vm2079 = vcmp.ge.s32.totalorder %v2078, 0
    %vm2080 = vcmp.lt.s32.totalorder %v2078, 512
    %vm2081 = vmand %vm2079, %vm2080
    %2082 = vst.msk [vmem:[#allocation2] sm:$0xf] %vm2081, %v2077
    // Predicated region
    $region14: #{tpu_custom_call.1} parent=1 // pred_check
      _
    $region15: #{tpu_custom_call.1} parent=1 // pred_check_branch
      %2084 = sbr.rel (0) target = $region17
    $region16: #{tpu_custom_call.1} parent=1 // pred_region
      %s2086 = ssub.s32 64, 64
      %2087 = vsyncadd [#allocation3], %s2086
      %s2089 = sshll.u32 [#allocation2], 4
      %s2090 = int_to_ptr.vmem [resolvable:$true] %s2089
      %2092 = dma.vmem_to_hbm [thread:$0]  %s2090, 64, %s3, [#allocation3]
    $region17: #{tpu_custom_call.1} parent=1 // pred_fallthru
      _
    // Predicated region
    $region18: #{tpu_custom_call.1} parent=1 // pred_check
      _
    $region19: #{tpu_custom_call.1} parent=1 // pred_check_branch
      %2094 = sbr.rel (0) target = $region21
    $region20: #{tpu_custom_call.1} parent=1 // pred_region
      %2095 = dma.done [#allocation3], 64
    $region21: #{tpu_custom_call.1} parent=1 // pred_fallthru
      _
    %2096 = vsyncpa [#allocation3], 1

</llo_original>
